<compile_context>
chip_gen: v7x
topology: tpu7x:2x2x1
jax: 0.10.0
libtpu: 0.0.40
codegen_flags: <defaults>
</compile_context>

<pallas_src>
import functools
import math

import jax
import jax.numpy as jnp
from jax.experimental import pallas as pl
from jax.experimental.pallas import tpu as pltpu


# ---------------------------------------------------------------------------
# Fused Pallas kernel.  Per batch b in the tile:
#   h0_b  = E @ S_b (+ r_add)               (pairwise expansion, MXU)
#   h     = relu(h0 + b0)                   (layer 0, pre-folded linear)
#   h     = relu(h @ W_l + b_l)             (hidden layers, all batches stacked)
#   out_b = (SEL @ h_b) @ W_last + n * b_last   (group sum + final affine fold)
# ---------------------------------------------------------------------------
def _make_fused_kernel(*, tile_b, rows_per_b, groups_per_b, has_e, has_r,
                       n_hidden, group_size):
    def kernel(*refs):
        h_buf = refs[-1]                     # VMEM scratch (tile_b*rows_per_b, mid)
        out_ref = refs[-2]
        in_refs = refs[:-2]

        idx = 0
        s_ref = in_refs[idx]; idx += 1       # (tile_b, s_rows, mid) streamed block
        e_val = None
        if has_e:
            e_val = in_refs[idx][...]; idx += 1      # (rows_per_b, s_rows) resident
        r_val = None
        if has_r:
            r_val = in_refs[idx][...]; idx += 1      # (rows_per_b, mid) resident
        b0 = in_refs[idx][...]; idx += 1             # (1, mid)
        hidden = []
        for _ in range(n_hidden):
            hidden.append((in_refs[idx][...], in_refs[idx + 1][...]))
            idx += 2
        w_last = in_refs[idx][...]; idx += 1         # (mid, latent)
        b_last = in_refs[idx][...]; idx += 1         # (1, latent)
        sel = in_refs[idx][...]; idx += 1            # (groups_per_b, rows_per_b)

        # ---- layer 0: pairwise expansion + bias + ReLU, written into VMEM scratch ----
        for bb in range(tile_b):
            s_bb = s_ref[bb]                                         # (s_rows, mid)
            if has_e:
                h0 = jnp.dot(e_val, s_bb, preferred_element_type=jnp.float32)
            else:
                h0 = s_bb
            if has_r:
                h0 = h0 + r_val
            h_buf[bb * rows_per_b:(bb + 1) * rows_per_b, :] = jnp.maximum(h0 + b0, 0.0)

        # ---- hidden layers: one big MXU matmul each over all stacked rows ----
        h = h_buf[...]
        for w, b in hidden:
            h = jnp.maximum(jnp.dot(h, w, preferred_element_type=jnp.float32) + b, 0.0)

        # ---- fused group sum (resident 0/1 SEL) + final affine folded after the sum ----
        for bb in range(tile_b):
            h_bb = h[bb * rows_per_b:(bb + 1) * rows_per_b, :]
            hg = jnp.dot(sel, h_bb, preferred_element_type=jnp.float32)   # (groups, mid)
            out_ref[bb * groups_per_b:(bb + 1) * groups_per_b, :] = (
                jnp.dot(hg, w_last, preferred_element_type=jnp.float32)
                + float(group_size) * b_last)

    return kernel


def _choose_tile_b(num_b, rows_per_b, groups_per_b, target_rows, max_unroll):
    tb = max(1, min(num_b, max(1, target_rows // max(1, rows_per_b)), max_unroll))
    if tb >= num_b and num_b >= 2:
        tb = (num_b + 1) // 2             # give the grid >= 2 steps (v7x megacore)
    if tb >= num_b:
        return num_b                      # single step: block dims == full dims
    if (tb * groups_per_b) % 8 != 0:      # output block sublane alignment
        need = 8 // math.gcd(8, groups_per_b)
        tb = max(need, (tb // need) * need)
        if tb >= num_b:
            return num_b
    return tb


def _fused_mlp_group_sum(S, E, r_add, mlp_params, SEL, *, rows_per_b, groups_per_b,
                         group_size, target_rows=4096, max_unroll=32):
    """For each batch b: rows_b = relu(E @ S[b] (+ r_add) + b0) -> hidden MLP ->
    per-group sum (SEL) -> final affine.  Returns (B * groups_per_b, latent)."""
    weights, biases = mlp_params
    depth = len(weights)
    assert depth >= 2
    num_b, s_rows, mid = S.shape
    latent = weights[-1].shape[1]
    n_hidden = depth - 2

    if E is None:
        assert rows_per_b == s_rows
    else:
        assert E.shape == (rows_per_b, s_rows)
    if r_add is not None:
        assert r_add.shape == (rows_per_b, mid)
    assert SEL.shape == (groups_per_b, rows_per_b)

    tile_b = _choose_tile_b(num_b, rows_per_b, groups_per_b, target_rows, max_unroll)
    b_pad = ((num_b + tile_b - 1) // tile_b) * tile_b
    if b_pad != num_b:                    # padded batches produce rows we slice off
        S = jnp.pad(S, ((0, b_pad - num_b), (0, 0), (0, 0)))

    args = [S.astype(jnp.float32)]
    in_specs = [pl.BlockSpec((tile_b, s_rows, mid), lambda g: (g, 0, 0))]

    def _resident(a):                     # whole 2D array, constant index_map -> VMEM resident
        args.append(a.astype(jnp.float32))
        in_specs.append(pl.BlockSpec(a.shape, lambda g: (0, 0)))

    if E is not None:
        _resident(E)
    if r_add is not None:
        _resident(r_add)
    _resident(biases[0].reshape(1, -1))
    for li in range(1, depth - 1):
        _resident(weights[li])
        _resident(biases[li].reshape(1, -1))
    _resident(weights[-1])
    _resident(biases[-1].reshape(1, -1))
    _resident(SEL)

    kernel = _make_fused_kernel(
        tile_b=tile_b, rows_per_b=rows_per_b, groups_per_b=groups_per_b,
        has_e=E is not None, has_r=r_add is not None,
        n_hidden=n_hidden, group_size=group_size)

    out = pl.pallas_call(
        kernel,
        out_shape=jax.ShapeDtypeStruct((b_pad * groups_per_b, latent), jnp.float32),
        grid_spec=pltpu.PrefetchScalarGridSpec(
            num_scalar_prefetch=0,
            grid=(b_pad // tile_b,),
            in_specs=in_specs,
            out_specs=pl.BlockSpec((tile_b * groups_per_b, latent), lambda g: (g, 0)),
            scratch_shapes=[pltpu.VMEM((tile_b * rows_per_b, mid), jnp.float32)],
        ),
        compiler_params=pltpu.CompilerParams(
            dimension_semantics=("parallel",),     # v7x: both TCs split the batch tiles
            vmem_limit_bytes=48 * 1024 * 1024,     # v7x-safe (64 MiB VMEM per TC)
        ),
    )(*args)
    return out[:num_b * groups_per_b]


# ---------------------------------------------------------------------------
# Expansion / reduction matrices (resident 0/1 selectors fed to the MXU)
# ---------------------------------------------------------------------------
def _pair_expansion(n):
    r = jnp.arange(n * n)
    i = r // n
    j = r % n
    e = jnp.concatenate([jax.nn.one_hot(i, n, dtype=jnp.float32),
                         jax.nn.one_hot(j, n, dtype=jnp.float32)], axis=1)   # (n^2, 2n)
    sel = jax.nn.one_hot(i, n, dtype=jnp.float32).T                          # (n, n^2)
    return e, sel


def _actor_expansion(n, action_size):
    r = jnp.arange(action_size * n)
    a = r // n
    i = r % n
    e = jax.nn.one_hot(i, n, dtype=jnp.float32)                              # (A*n, n)
    sel = jax.nn.one_hot(a, action_size, dtype=jnp.float32).T                # (A, A*n)
    return e, sel


# ---------------------------------------------------------------------------
# GraphActorCritic forward (thin JAX glue: only tiny O(B*n*mid) projections here)
# ---------------------------------------------------------------------------
def _append_index(x):
    """torch: concat([x.unsqueeze(-1), tile(arange(n)/n).unsqueeze(-1)], -1)."""
    n = x.shape[-1]
    coor = jnp.arange(n, dtype=jnp.float32) / float(n)
    coor = jnp.broadcast_to(coor, x.shape)
    return jnp.stack([x, coor], axis=-1)


@functools.partial(jax.jit, static_argnames=("action_size",))
def graph_actor_critic_forward(params, obs, *, action_size):
    obs = obs.astype(jnp.float32)
    batch, n = obs.shape

    mw, mb = params["messenger"]
    aw, ab = params["actor"]
    cw, cb = params["critic"]
    mid = mw[0].shape[1]
    latent = mw[-1].shape[1]
    assert latent == 1, "GraphActorCritic requires latent_size == 1"
    actor_out = aw[-1].shape[1]

    # prep_input: x (B, n, 2)
    x = _append_index(obs)
    x2 = x.reshape(batch * n, 2)

    # ---- messenger: msg[b,i] = sum_j MLP([x_i, x_j]) ----
    # layer-0 pre-fold: layer0([x_i, x_j]) = x_i @ W0[:2] + x_j @ W0[2:] + b0
    u = (x2 @ mw[0][0:2]).reshape(batch, n, mid)
    v = (x2 @ mw[0][2:4]).reshape(batch, n, mid)
    s_msg = jnp.concatenate([u, v], axis=1)                       # (B, 2n, mid)
    e_msg, sel_msg = _pair_expansion(n)
    msg = _fused_mlp_group_sum(s_msg, e_msg, None, (mw, mb), sel_msg,
                               rows_per_b=n * n, groups_per_b=n, group_size=n)
    msg = msg.reshape(batch, n)

    m = _append_index(msg)                                        # (B, n, 2)
    m2 = m.reshape(batch * n, 2)

    # ---- actor: logits[b,a] = sum_i MLP([m_i, a]) ----
    p = (m2 @ aw[0][0:2]).reshape(batch, n, mid)                  # per-(b,i) part
    acts = jnp.arange(action_size, dtype=jnp.float32)[:, None]
    q = acts @ aw[0][2:3]                                         # (A, mid) per-action part
    q_exp = jnp.repeat(q, n, axis=0)                              # (A*n, mid), batch-independent
    e_act, sel_act = _actor_expansion(n, action_size)
    out_a = _fused_mlp_group_sum(p, e_act, q_exp, (aw, ab), sel_act,
                                 rows_per_b=action_size * n, groups_per_b=action_size,
                                 group_size=n)
    logits = out_a.reshape(batch, action_size, actor_out)
    if actor_out == 1:
        logits = logits[..., 0]

    # ---- critic: value[b] = sum_i MLP([m_i, obs_i]) ----
    c_feat = jnp.concatenate([m2, obs.reshape(batch * n, 1)], axis=1)   # (B*n, 3)
    c = (c_feat @ cw[0]).reshape(batch, n, mid)                   # full layer-0 linear
    sel_crit = jnp.ones((1, n), jnp.float32)
    value = _fused_mlp_group_sum(c, None, None, (cw, cb), sel_crit,
                                 rows_per_b=n, groups_per_b=1, group_size=n)
    value = value.reshape(batch)

    return logits, value


# ---------------------------------------------------------------------------
# Parameter init (MLPModel: Linear(in,mid), ReLU, [Linear(mid,mid), ReLU]*(d-2),
#                 Linear(mid,out))
# ---------------------------------------------------------------------------
def _init_mlp(key, in_dim, depth, mid, out_dim):
    dims = [in_dim] + [mid] * (depth - 1) + [out_dim]
    keys = jax.random.split(key, 2 * depth)
    ws, bs = [], []
    for i in range(depth):
        fan_in, fan_out = dims[i], dims[i + 1]
        limit = math.sqrt(6.0 / (fan_in + fan_out))
        ws.append(jax.random.uniform(keys[2 * i], (fan_in, fan_out), jnp.float32,
                                     minval=-limit, maxval=limit))
        bs.append(jax.random.uniform(keys[2 * i + 1], (fan_out,), jnp.float32,
                                     minval=-0.1, maxval=0.1))
    return ws, bs


def init_params(key, depth, mid_weight, latent_size, continuous_actions=False):
    k1, k2, k3 = jax.random.split(key, 3)
    actor_out = latent_size * (2 if continuous_actions else 1)
    return {
        "messenger": _init_mlp(k1, 4, depth, mid_weight, latent_size),
        "actor": _init_mlp(k2, 3, depth, mid_weight, actor_out),
        "critic": _init_mlp(k3, 3, depth, mid_weight, latent_size),
    }


# ---------------------------------------------------------------------------
# Pure-JAX reference that mirrors the PyTorch op ordering (sanity check)
# ---------------------------------------------------------------------------
def _mlp_ref(mlp_params, x):
    weights, biases = mlp_params
    h = x
    for w, b in zip(weights[:-1], biases[:-1]):
        h = jax.nn.relu(jnp.dot(h, w, precision=jax.lax.Precision.HIGHEST) + b)
    return jnp.dot(h, weights[-1], precision=jax.lax.Precision.HIGHEST) + biases[-1]


def _reference_forward(params, obs, action_size):
    obs = obs.astype(jnp.float32)
    batch, n = obs.shape
    x = _append_index(obs)                                           # (B, n, 2)
    xi = jnp.broadcast_to(x[:, :, None, :], (batch, n, n, 2))
    xj = jnp.broadcast_to(x[:, None, :, :], (batch, n, n, 2))
    msg_in = jnp.concatenate([xi, xj], axis=-1)                      # (B, n, n, 4)
    messages = _mlp_ref(params["messenger"], msg_in)                 # (B, n, n, 1)
    msg = jnp.sum(messages, axis=-2)[..., 0]                         # (B, n)
    m = _append_index(msg)                                           # (B, n, 2)
    acts = jnp.arange(action_size, dtype=jnp.float32)
    am_i = jnp.broadcast_to(m[:, :, None, :], (batch, n, action_size, 2))
    am_j = jnp.broadcast_to(acts[None, None, :, None], (batch, n, action_size, 1))
    am = jnp.concatenate([am_i, am_j], axis=-1)                      # (B, n, A, 3)
    am_messages = _mlp_ref(params["actor"], am)                      # (B, n, A, 1)
    logits = jnp.sum(am_messages, axis=-3)[..., 0]                   # (B, A)
    c_in = jnp.concatenate([m, obs[..., None]], axis=-1)             # (B, n, 3)
    c_out = _mlp_ref(params["critic"], c_in)                         # (B, n, 1)
    value = jnp.sum(c_out, axis=-2)[..., 0]                          # (B,)
    return logits, value


if __name__ == "__main__":
    key = jax.random.PRNGKey(0)
    k_params, k_obs = jax.random.split(key)

    batch, n_nodes = 2, 8
    depth, mid_weight, latent_size, action_size = 3, 32, 1, 6

    params = init_params(k_params, depth=depth, mid_weight=mid_weight,
                         latent_size=latent_size)
    obs = jax.random.normal(k_obs, (batch, n_nodes), jnp.float32)

    logits, value = graph_actor_critic_forward(params, obs, action_size=action_size)
    logits, value = jax.block_until_ready((logits, value))
    assert logits.shape == (batch, action_size), logits.shape
    assert value.shape == (batch,), value.shape

    ref_logits, ref_value = _reference_forward(params, obs, action_size)
    err_l = float(jnp.max(jnp.abs(logits - ref_logits)))
    err_v = float(jnp.max(jnp.abs(value - ref_value)))
    assert jnp.allclose(logits, ref_logits, rtol=1e-2, atol=1e-2), err_l
    assert jnp.allclose(value, ref_value, rtol=1e-2, atol=1e-2), err_v

    print("KERNEL_OK")
</pallas_src>

<mosaic_0001>
module attributes {stable_mosaic.version = 11 : i64} {
  func.func @kernel(%arg0: i32, %arg1: memref<1x16x32xf32, #tpu.memory_space<vmem>>, %arg2: memref<64x16xf32, #tpu.memory_space<vmem>>, %arg3: memref<1x32xf32, #tpu.memory_space<vmem>>, %arg4: memref<32x32xf32, #tpu.memory_space<vmem>>, %arg5: memref<1x32xf32, #tpu.memory_space<vmem>>, %arg6: memref<32x1xf32, #tpu.memory_space<vmem>>, %arg7: memref<1x1xf32, #tpu.memory_space<vmem>>, %arg8: memref<8x64xf32, #tpu.memory_space<vmem>>, %arg9: memref<8x1xf32, #tpu.memory_space<vmem>>, %arg10: memref<64x32xf32, #tpu.memory_space<vmem>>) attributes {dimension_semantics = [#tpu.dimension_semantics<parallel>], iteration_bounds = array<i64: 2>, scalar_prefetch = 0 : i64, scratch_operands = 1 : i64, tpu.core_type = #tpu.core_type<tc>, window_params = [{transform_indices = @transform_0, window_bounds = array<i64: 1, 16, 32>}, {pipeline_mode = #tpu.pipeline_mode<synchronous>, transform_indices = @transform_1, window_bounds = array<i64: 64, 16>}, {pipeline_mode = #tpu.pipeline_mode<synchronous>, transform_indices = @transform_2, window_bounds = array<i64: 1, 32>}, {pipeline_mode = #tpu.pipeline_mode<synchronous>, transform_indices = @transform_3, window_bounds = array<i64: 32, 32>}, {pipeline_mode = #tpu.pipeline_mode<synchronous>, transform_indices = @transform_4, window_bounds = array<i64: 1, 32>}, {pipeline_mode = #tpu.pipeline_mode<synchronous>, transform_indices = @transform_5, window_bounds = array<i64: 32, 1>}, {pipeline_mode = #tpu.pipeline_mode<synchronous>, transform_indices = @transform_6, window_bounds = array<i64: 1, 1>}, {pipeline_mode = #tpu.pipeline_mode<synchronous>, transform_indices = @transform_7, window_bounds = array<i64: 8, 64>}, {transform_indices = @transform_8, window_bounds = array<i64: 8, 1>}]} {
    %c0 = arith.constant 0 : index
    %c0_0 = arith.constant 0 : index
    %0 = vector.load %arg2[%c0, %c0_0] : memref<64x16xf32, #tpu.memory_space<vmem>>, vector<64x16xf32>
    %c0_1 = arith.constant 0 : index
    %c0_2 = arith.constant 0 : index
    %1 = vector.load %arg3[%c0_1, %c0_2] : memref<1x32xf32, #tpu.memory_space<vmem>>, vector<1x32xf32>
    %c0_3 = arith.constant 0 : index
    %c0_4 = arith.constant 0 : index
    %2 = vector.load %arg4[%c0_3, %c0_4] : memref<32x32xf32, #tpu.memory_space<vmem>>, vector<32x32xf32>
    %c0_5 = arith.constant 0 : index
    %c0_6 = arith.constant 0 : index
    %3 = vector.load %arg5[%c0_5, %c0_6] : memref<1x32xf32, #tpu.memory_space<vmem>>, vector<1x32xf32>
    %c0_7 = arith.constant 0 : index
    %c0_8 = arith.constant 0 : index
    %4 = vector.load %arg6[%c0_7, %c0_8] : memref<32x1xf32, #tpu.memory_space<vmem>>, vector<32x1xf32>
    %c0_9 = arith.constant 0 : index
    %c0_10 = arith.constant 0 : index
    %5 = vector.load %arg7[%c0_9, %c0_10] : memref<1x1xf32, #tpu.memory_space<vmem>>, vector<1x1xf32>
    %c0_11 = arith.constant 0 : index
    %c0_12 = arith.constant 0 : index
    %6 = vector.load %arg8[%c0_11, %c0_12] : memref<8x64xf32, #tpu.memory_space<vmem>>, vector<8x64xf32>
    %c0_13 = arith.constant 0 : index
    %c0_14 = arith.constant 0 : index
    %c0_15 = arith.constant 0 : index
    %7 = vector.load %arg1[%c0_13, %c0_14, %c0_15] : memref<1x16x32xf32, #tpu.memory_space<vmem>>, vector<1x16x32xf32>
    %8 = vector.shape_cast %7 : vector<1x16x32xf32> to vector<16x32xf32>
    %cst = arith.constant dense<0.000000e+00> : vector<64x32xf32>
    %9 = tpu.matmul %0, %8, %cst {dimension_numbers = #tpu.dot_dimension_numbers<[1], [0], [0], [1], [0, 0, 1, 1], [], []>} : vector<64x16xf32>, vector<16x32xf32>, vector<64x32xf32> -> vector<64x32xf32>
    %10 = vector.broadcast %1 : vector<1x32xf32> to vector<64x32xf32>
    %11 = arith.addf %9, %10 : vector<64x32xf32>
    %cst_16 = arith.constant 0.000000e+00 : f32
    %12 = vector.broadcast %cst_16 : f32 to vector<64x32xf32>
    %13 = arith.maximumf %11, %12 : vector<64x32xf32>
    %c0_17 = arith.constant 0 : index
    %c0_18 = arith.constant 0 : index
    %14 = vector.load %arg10[%c0_17, %c0_18] : memref<64x32xf32, #tpu.memory_space<vmem>>, vector<64x32xf32>
    tpu.vector_store %arg10[%c0_17, %c0_18], %13 {strides = array<i32>} : memref<64x32xf32, #tpu.memory_space<vmem>>, vector<64x32xf32>,
    %c0_19 = arith.constant 0 : index
    %c0_20 = arith.constant 0 : index
    %15 = vector.load %arg10[%c0_19, %c0_20] : memref<64x32xf32, #tpu.memory_space<vmem>>, vector<64x32xf32>
    %cst_21 = arith.constant dense<0.000000e+00> : vector<64x32xf32>
    %16 = tpu.matmul %15, %2, %cst_21 {dimension_numbers = #tpu.dot_dimension_numbers<[1], [0], [0], [1], [0, 0, 1, 1], [], []>} : vector<64x32xf32>, vector<32x32xf32>, vector<64x32xf32> -> vector<64x32xf32>
    %17 = vector.broadcast %3 : vector<1x32xf32> to vector<64x32xf32>
    %18 = arith.addf %16, %17 : vector<64x32xf32>
    %cst_22 = arith.constant 0.000000e+00 : f32
    %19 = vector.broadcast %cst_22 : f32 to vector<64x32xf32>
    %20 = arith.maximumf %18, %19 : vector<64x32xf32>
    %cst_23 = arith.constant dense<0.000000e+00> : vector<8x32xf32>
    %21 = tpu.matmul %6, %20, %cst_23 {dimension_numbers = #tpu.dot_dimension_numbers<[1], [0], [0], [1], [0, 0, 1, 1], [], []>} : vector<8x64xf32>, vector<64x32xf32>, vector<8x32xf32> -> vector<8x32xf32>
    %cst_24 = arith.constant dense<0.000000e+00> : vector<8x1xf32>
    %22 = tpu.matmul %21, %4, %cst_24 {dimension_numbers = #tpu.dot_dimension_numbers<[1], [0], [0], [1], [0, 0, 1, 1], [], []>} : vector<8x32xf32>, vector<32x1xf32>, vector<8x1xf32> -> vector<8x1xf32>
    %cst_25 = arith.constant 8.000000e+00 : f32
    %23 = vector.broadcast %cst_25 : f32 to vector<1x1xf32>
    %24 = arith.mulf %23, %5 : vector<1x1xf32>
    %25 = vector.broadcast %24 : vector<1x1xf32> to vector<8x1xf32>
    %26 = arith.addf %22, %25 : vector<8x1xf32>
    %c0_26 = arith.constant 0 : index
    %c0_27 = arith.constant 0 : index
    %27 = vector.load %arg9[%c0_26, %c0_27] : memref<8x1xf32, #tpu.memory_space<vmem>>, vector<8x1xf32>
    tpu.vector_store %arg9[%c0_26, %c0_27], %26 {strides = array<i32>} : memref<8x1xf32, #tpu.memory_space<vmem>>, vector<8x1xf32>,
    return
  }
  func.func @transform_0(%arg0: i32) -> (i32, i32, i32) {
    %c0_i32 = arith.constant 0 : i32
    %c0_i32_0 = arith.constant 0 : i32
    %c0_i32_1 = arith.constant 0 : i32
    return %arg0, %c0_i32, %c0_i32_0 : i32, i32, i32
  }
  func.func @transform_1(%arg0: i32) -> (i32, i32) {
    %c0_i32 = arith.constant 0 : i32
    %c0_i32_0 = arith.constant 0 : i32
    %c0_i32_1 = arith.constant 0 : i32
    return %c0_i32, %c0_i32_0 : i32, i32
  }
  func.func @transform_2(%arg0: i32) -> (i32, i32) {
    %c0_i32 = arith.constant 0 : i32
    %c0_i32_0 = arith.constant 0 : i32
    %c0_i32_1 = arith.constant 0 : i32
    return %c0_i32, %c0_i32_0 : i32, i32
  }
  func.func @transform_3(%arg0: i32) -> (i32, i32) {
    %c0_i32 = arith.constant 0 : i32
    %c0_i32_0 = arith.constant 0 : i32
    %c0_i32_1 = arith.constant 0 : i32
    return %c0_i32, %c0_i32_0 : i32, i32
  }
  func.func @transform_4(%arg0: i32) -> (i32, i32) {
    %c0_i32 = arith.constant 0 : i32
    %c0_i32_0 = arith.constant 0 : i32
    %c0_i32_1 = arith.constant 0 : i32
    return %c0_i32, %c0_i32_0 : i32, i32
  }
  func.func @transform_5(%arg0: i32) -> (i32, i32) {
    %c0_i32 = arith.constant 0 : i32
    %c0_i32_0 = arith.constant 0 : i32
    %c0_i32_1 = arith.constant 0 : i32
    return %c0_i32, %c0_i32_0 : i32, i32
  }
  func.func @transform_6(%arg0: i32) -> (i32, i32) {
    %c0_i32 = arith.constant 0 : i32
    %c0_i32_0 = arith.constant 0 : i32
    %c0_i32_1 = arith.constant 0 : i32
    return %c0_i32, %c0_i32_0 : i32, i32
  }
  func.func @transform_7(%arg0: i32) -> (i32, i32) {
    %c0_i32 = arith.constant 0 : i32
    %c0_i32_0 = arith.constant 0 : i32
    %c0_i32_1 = arith.constant 0 : i32
    return %c0_i32, %c0_i32_0 : i32, i32
  }
  func.func @transform_8(%arg0: i32) -> (i32, i32) {
    %c0_i32 = arith.constant 0 : i32
    %c0_i32_0 = arith.constant 0 : i32
    return %arg0, %c0_i32 : i32, i32
  }
}

module attributes {stable_mosaic.version = 11 : i64} {
  func.func @kernel(%arg0: i32, %arg1: memref<2x8x32xf32, #tpu.memory_space<vmem>>, %arg2: memref<48x8xf32, #tpu.memory_space<vmem>>, %arg3: memref<48x32xf32, #tpu.memory_space<vmem>>, %arg4: memref<1x32xf32, #tpu.memory_space<vmem>>, %arg5: memref<32x32xf32, #tpu.memory_space<vmem>>, %arg6: memref<1x32xf32, #tpu.memory_space<vmem>>, %arg7: memref<32x1xf32, #tpu.memory_space<vmem>>, %arg8: memref<1x1xf32, #tpu.memory_space<vmem>>, %arg9: memref<6x48xf32, #tpu.memory_space<vmem>>, %arg10: memref<12x1xf32, #tpu.memory_space<vmem>>, %arg11: memref<96x32xf32, #tpu.memory_space<vmem>>) attributes {dimension_semantics = [#tpu.dimension_semantics<parallel>], iteration_bounds = array<i64: 1>, scalar_prefetch = 0 : i64, scratch_operands = 1 : i64, tpu.core_type = #tpu.core_type<tc>, window_params = [{transform_indices = @transform_0, window_bounds = array<i64: 2, 8, 32>}, {pipeline_mode = #tpu.pipeline_mode<synchronous>, transform_indices = @transform_1, window_bounds = array<i64: 48, 8>}, {pipeline_mode = #tpu.pipeline_mode<synchronous>, transform_indices = @transform_2, window_bounds = array<i64: 48, 32>}, {pipeline_mode = #tpu.pipeline_mode<synchronous>, transform_indices = @transform_3, window_bounds = array<i64: 1, 32>}, {pipeline_mode = #tpu.pipeline_mode<synchronous>, transform_indices = @transform_4, window_bounds = array<i64: 32, 32>}, {pipeline_mode = #tpu.pipeline_mode<synchronous>, transform_indices = @transform_5, window_bounds = array<i64: 1, 32>}, {pipeline_mode = #tpu.pipeline_mode<synchronous>, transform_indices = @transform_6, window_bounds = array<i64: 32, 1>}, {pipeline_mode = #tpu.pipeline_mode<synchronous>, transform_indices = @transform_7, window_bounds = array<i64: 1, 1>}, {pipeline_mode = #tpu.pipeline_mode<synchronous>, transform_indices = @transform_8, window_bounds = array<i64: 6, 48>}, {transform_indices = @transform_9, window_bounds = array<i64: 12, 1>}]} {
    %c0 = arith.constant 0 : index
    %c0_0 = arith.constant 0 : index
    %0 = vector.load %arg2[%c0, %c0_0] : memref<48x8xf32, #tpu.memory_space<vmem>>, vector<48x8xf32>
    %c0_1 = arith.constant 0 : index
    %c0_2 = arith.constant 0 : index
    %1 = vector.load %arg3[%c0_1, %c0_2] : memref<48x32xf32, #tpu.memory_space<vmem>>, vector<48x32xf32>
    %c0_3 = arith.constant 0 : index
    %c0_4 = arith.constant 0 : index
    %2 = vector.load %arg4[%c0_3, %c0_4] : memref<1x32xf32, #tpu.memory_space<vmem>>, vector<1x32xf32>
    %c0_5 = arith.constant 0 : index
    %c0_6 = arith.constant 0 : index
    %3 = vector.load %arg5[%c0_5, %c0_6] : memref<32x32xf32, #tpu.memory_space<vmem>>, vector<32x32xf32>
    %c0_7 = arith.constant 0 : index
    %c0_8 = arith.constant 0 : index
    %4 = vector.load %arg6[%c0_7, %c0_8] : memref<1x32xf32, #tpu.memory_space<vmem>>, vector<1x32xf32>
    %c0_9 = arith.constant 0 : index
    %c0_10 = arith.constant 0 : index
    %5 = vector.load %arg7[%c0_9, %c0_10] : memref<32x1xf32, #tpu.memory_space<vmem>>, vector<32x1xf32>
    %c0_11 = arith.constant 0 : index
    %c0_12 = arith.constant 0 : index
    %6 = vector.load %arg8[%c0_11, %c0_12] : memref<1x1xf32, #tpu.memory_space<vmem>>, vector<1x1xf32>
    %c0_13 = arith.constant 0 : index
    %c0_14 = arith.constant 0 : index
    %7 = vector.load %arg9[%c0_13, %c0_14] : memref<6x48xf32, #tpu.memory_space<vmem>>, vector<6x48xf32>
    %c0_15 = arith.constant 0 : index
    %c0_16 = arith.constant 0 : index
    %c0_17 = arith.constant 0 : index
    %8 = vector.load %arg1[%c0_15, %c0_16, %c0_17] : memref<2x8x32xf32, #tpu.memory_space<vmem>>, vector<1x8x32xf32>
    %9 = vector.shape_cast %8 : vector<1x8x32xf32> to vector<8x32xf32>
    %cst = arith.constant dense<0.000000e+00> : vector<48x32xf32>
    %10 = tpu.matmul %0, %9, %cst {dimension_numbers = #tpu.dot_dimension_numbers<[1], [0], [0], [1], [0, 0, 1, 1], [], []>} : vector<48x8xf32>, vector<8x32xf32>, vector<48x32xf32> -> vector<48x32xf32>
    %11 = arith.addf %10, %1 : vector<48x32xf32>
    %12 = vector.broadcast %2 : vector<1x32xf32> to vector<48x32xf32>
    %13 = arith.addf %11, %12 : vector<48x32xf32>
    %cst_18 = arith.constant 0.000000e+00 : f32
    %14 = vector.broadcast %cst_18 : f32 to vector<48x32xf32>
    %15 = arith.maximumf %13, %14 : vector<48x32xf32>
    %c0_19 = arith.constant 0 : index
    %c0_20 = arith.constant 0 : index
    %16 = vector.load %arg11[%c0_19, %c0_20] : memref<96x32xf32, #tpu.memory_space<vmem>>, vector<48x32xf32>
    tpu.vector_store %arg11[%c0_19, %c0_20], %15 {strides = array<i32>} : memref<96x32xf32, #tpu.memory_space<vmem>>, vector<48x32xf32>,
    %c1 = arith.constant 1 : index
    %c0_21 = arith.constant 0 : index
    %c0_22 = arith.constant 0 : index
    %17 = vector.load %arg1[%c1, %c0_21, %c0_22] : memref<2x8x32xf32, #tpu.memory_space<vmem>>, vector<1x8x32xf32>
    %18 = vector.shape_cast %17 : vector<1x8x32xf32> to vector<8x32xf32>
    %cst_23 = arith.constant dense<0.000000e+00> : vector<48x32xf32>
    %19 = tpu.matmul %0, %18, %cst_23 {dimension_numbers = #tpu.dot_dimension_numbers<[1], [0], [0], [1], [0, 0, 1, 1], [], []>} : vector<48x8xf32>, vector<8x32xf32>, vector<48x32xf32> -> vector<48x32xf32>
    %20 = arith.addf %19, %1 : vector<48x32xf32>
    %21 = vector.broadcast %2 : vector<1x32xf32> to vector<48x32xf32>
    %22 = arith.addf %20, %21 : vector<48x32xf32>
    %cst_24 = arith.constant 0.000000e+00 : f32
    %23 = vector.broadcast %cst_24 : f32 to vector<48x32xf32>
    %24 = arith.maximumf %22, %23 : vector<48x32xf32>
    %c48 = arith.constant 48 : index
    %c0_25 = arith.constant 0 : index
    %25 = vector.load %arg11[%c48, %c0_25] : memref<96x32xf32, #tpu.memory_space<vmem>>, vector<48x32xf32>
    tpu.vector_store %arg11[%c48, %c0_25], %24 {strides = array<i32>} : memref<96x32xf32, #tpu.memory_space<vmem>>, vector<48x32xf32>,
    %c0_26 = arith.constant 0 : index
    %c0_27 = arith.constant 0 : index
    %26 = vector.load %arg11[%c0_26, %c0_27] : memref<96x32xf32, #tpu.memory_space<vmem>>, vector<96x32xf32>
    %cst_28 = arith.constant dense<0.000000e+00> : vector<96x32xf32>
    %27 = tpu.matmul %26, %3, %cst_28 {dimension_numbers = #tpu.dot_dimension_numbers<[1], [0], [0], [1], [0, 0, 1, 1], [], []>} : vector<96x32xf32>, vector<32x32xf32>, vector<96x32xf32> -> vector<96x32xf32>
    %28 = vector.broadcast %4 : vector<1x32xf32> to vector<96x32xf32>
    %29 = arith.addf %27, %28 : vector<96x32xf32>
    %cst_29 = arith.constant 0.000000e+00 : f32
    %30 = vector.broadcast %cst_29 : f32 to vector<96x32xf32>
    %31 = arith.maximumf %29, %30 : vector<96x32xf32>
    %32 = vector.extract_strided_slice %31 {offsets = [0, 0], sizes = [48, 32], strides = [1, 1]} : vector<96x32xf32> to vector<48x32xf32>
    %cst_30 = arith.constant dense<0.000000e+00> : vector<6x32xf32>
    %33 = tpu.matmul %7, %32, %cst_30 {dimension_numbers = #tpu.dot_dimension_numbers<[1], [0], [0], [1], [0, 0, 1, 1], [], []>} : vector<6x48xf32>, vector<48x32xf32>, vector<6x32xf32> -> vector<6x32xf32>
    %cst_31 = arith.constant dense<0.000000e+00> : vector<6x1xf32>
    %34 = tpu.matmul %33, %5, %cst_31 {dimension_numbers = #tpu.dot_dimension_numbers<[1], [0], [0], [1], [0, 0, 1, 1], [], []>} : vector<6x32xf32>, vector<32x1xf32>, vector<6x1xf32> -> vector<6x1xf32>
    %cst_32 = arith.constant 8.000000e+00 : f32
    %35 = vector.broadcast %cst_32 : f32 to vector<1x1xf32>
    %36 = arith.mulf %35, %6 : vector<1x1xf32>
    %37 = vector.broadcast %36 : vector<1x1xf32> to vector<6x1xf32>
    %38 = arith.addf %34, %37 : vector<6x1xf32>
    %c0_33 = arith.constant 0 : index
    %c0_34 = arith.constant 0 : index
    %39 = vector.load %arg10[%c0_33, %c0_34] : memref<12x1xf32, #tpu.memory_space<vmem>>, vector<6x1xf32>
    tpu.vector_store %arg10[%c0_33, %c0_34], %38 {strides = array<i32>} : memref<12x1xf32, #tpu.memory_space<vmem>>, vector<6x1xf32>,
    %40 = vector.extract_strided_slice %31 {offsets = [48, 0], sizes = [48, 32], strides = [1, 1]} : vector<96x32xf32> to vector<48x32xf32>
    %cst_35 = arith.constant dense<0.000000e+00> : vector<6x32xf32>
    %41 = tpu.matmul %7, %40, %cst_35 {dimension_numbers = #tpu.dot_dimension_numbers<[1], [0], [0], [1], [0, 0, 1, 1], [], []>} : vector<6x48xf32>, vector<48x32xf32>, vector<6x32xf32> -> vector<6x32xf32>
    %cst_36 = arith.constant dense<0.000000e+00> : vector<6x1xf32>
    %42 = tpu.matmul %41, %5, %cst_36 {dimension_numbers = #tpu.dot_dimension_numbers<[1], [0], [0], [1], [0, 0, 1, 1], [], []>} : vector<6x32xf32>, vector<32x1xf32>, vector<6x1xf32> -> vector<6x1xf32>
    %cst_37 = arith.constant 8.000000e+00 : f32
    %43 = vector.broadcast %cst_37 : f32 to vector<1x1xf32>
    %44 = arith.mulf %43, %6 : vector<1x1xf32>
    %45 = vector.broadcast %44 : vector<1x1xf32> to vector<6x1xf32>
    %46 = arith.addf %42, %45 : vector<6x1xf32>
    %c6 = arith.constant 6 : index
    %c0_38 = arith.constant 0 : index
    %47 = vector.load %arg10[%c6, %c0_38] : memref<12x1xf32, #tpu.memory_space<vmem>>, vector<6x1xf32>
    tpu.vector_store %arg10[%c6, %c0_38], %46 {strides = array<i32>} : memref<12x1xf32, #tpu.memory_space<vmem>>, vector<6x1xf32>,
    return
  }
  func.func @transform_0(%arg0: i32) -> (i32, i32, i32) {
    %c0_i32 = arith.constant 0 : i32
    %c0_i32_0 = arith.constant 0 : i32
    %c0_i32_1 = arith.constant 0 : i32
    return %arg0, %c0_i32, %c0_i32_0 : i32, i32, i32
  }
  func.func @transform_1(%arg0: i32) -> (i32, i32) {
    %c0_i32 = arith.constant 0 : i32
    %c0_i32_0 = arith.constant 0 : i32
    %c0_i32_1 = arith.constant 0 : i32
    return %c0_i32, %c0_i32_0 : i32, i32
  }
  func.func @transform_2(%arg0: i32) -> (i32, i32) {
    %c0_i32 = arith.constant 0 : i32
    %c0_i32_0 = arith.constant 0 : i32
    %c0_i32_1 = arith.constant 0 : i32
    return %c0_i32, %c0_i32_0 : i32, i32
  }
  func.func @transform_3(%arg0: i32) -> (i32, i32) {
    %c0_i32 = arith.constant 0 : i32
    %c0_i32_0 = arith.constant 0 : i32
    %c0_i32_1 = arith.constant 0 : i32
    return %c0_i32, %c0_i32_0 : i32, i32
  }
  func.func @transform_4(%arg0: i32) -> (i32, i32) {
    %c0_i32 = arith.constant 0 : i32
    %c0_i32_0 = arith.constant 0 : i32
    %c0_i32_1 = arith.constant 0 : i32
    return %c0_i32, %c0_i32_0 : i32, i32
  }
  func.func @transform_5(%arg0: i32) -> (i32, i32) {
    %c0_i32 = arith.constant 0 : i32
    %c0_i32_0 = arith.constant 0 : i32
    %c0_i32_1 = arith.constant 0 : i32
    return %c0_i32, %c0_i32_0 : i32, i32
  }
  func.func @transform_6(%arg0: i32) -> (i32, i32) {
    %c0_i32 = arith.constant 0 : i32
    %c0_i32_0 = arith.constant 0 : i32
    %c0_i32_1 = arith.constant 0 : i32
    return %c0_i32, %c0_i32_0 : i32, i32
  }
  func.func @transform_7(%arg0: i32) -> (i32, i32) {
    %c0_i32 = arith.constant 0 : i32
    %c0_i32_0 = arith.constant 0 : i32
    %c0_i32_1 = arith.constant 0 : i32
    return %c0_i32, %c0_i32_0 : i32, i32
  }
  func.func @transform_8(%arg0: i32) -> (i32, i32) {
    %c0_i32 = arith.constant 0 : i32
    %c0_i32_0 = arith.constant 0 : i32
    %c0_i32_1 = arith.constant 0 : i32
    return %c0_i32, %c0_i32_0 : i32, i32
  }
  func.func @transform_9(%arg0: i32) -> (i32, i32) {
    %c0_i32 = arith.constant 0 : i32
    %c0_i32_0 = arith.constant 0 : i32
    return %arg0, %c0_i32 : i32, i32
  }
}

module attributes {stable_mosaic.version = 11 : i64} {
  func.func @kernel(%arg0: i32, %arg1: memref<2x8x32xf32, #tpu.memory_space<vmem>>, %arg2: memref<1x32xf32, #tpu.memory_space<vmem>>, %arg3: memref<32x32xf32, #tpu.memory_space<vmem>>, %arg4: memref<1x32xf32, #tpu.memory_space<vmem>>, %arg5: memref<32x1xf32, #tpu.memory_space<vmem>>, %arg6: memref<1x1xf32, #tpu.memory_space<vmem>>, %arg7: memref<1x8xf32, #tpu.memory_space<vmem>>, %arg8: memref<2x1xf32, #tpu.memory_space<vmem>>, %arg9: memref<16x32xf32, #tpu.memory_space<vmem>>) attributes {dimension_semantics = [#tpu.dimension_semantics<parallel>], iteration_bounds = array<i64: 1>, scalar_prefetch = 0 : i64, scratch_operands = 1 : i64, tpu.core_type = #tpu.core_type<tc>, window_params = [{transform_indices = @transform_0, window_bounds = array<i64: 2, 8, 32>}, {pipeline_mode = #tpu.pipeline_mode<synchronous>, transform_indices = @transform_1, window_bounds = array<i64: 1, 32>}, {pipeline_mode = #tpu.pipeline_mode<synchronous>, transform_indices = @transform_2, window_bounds = array<i64: 32, 32>}, {pipeline_mode = #tpu.pipeline_mode<synchronous>, transform_indices = @transform_3, window_bounds = array<i64: 1, 32>}, {pipeline_mode = #tpu.pipeline_mode<synchronous>, transform_indices = @transform_4, window_bounds = array<i64: 32, 1>}, {pipeline_mode = #tpu.pipeline_mode<synchronous>, transform_indices = @transform_5, window_bounds = array<i64: 1, 1>}, {pipeline_mode = #tpu.pipeline_mode<synchronous>, transform_indices = @transform_6, window_bounds = array<i64: 1, 8>}, {transform_indices = @transform_7, window_bounds = array<i64: 2, 1>}]} {
    %c0 = arith.constant 0 : index
    %c0_0 = arith.constant 0 : index
    %0 = vector.load %arg2[%c0, %c0_0] : memref<1x32xf32, #tpu.memory_space<vmem>>, vector<1x32xf32>
    %c0_1 = arith.constant 0 : index
    %c0_2 = arith.constant 0 : index
    %1 = vector.load %arg3[%c0_1, %c0_2] : memref<32x32xf32, #tpu.memory_space<vmem>>, vector<32x32xf32>
    %c0_3 = arith.constant 0 : index
    %c0_4 = arith.constant 0 : index
    %2 = vector.load %arg4[%c0_3, %c0_4] : memref<1x32xf32, #tpu.memory_space<vmem>>, vector<1x32xf32>
    %c0_5 = arith.constant 0 : index
    %c0_6 = arith.constant 0 : index
    %3 = vector.load %arg5[%c0_5, %c0_6] : memref<32x1xf32, #tpu.memory_space<vmem>>, vector<32x1xf32>
    %c0_7 = arith.constant 0 : index
    %c0_8 = arith.constant 0 : index
    %4 = vector.load %arg6[%c0_7, %c0_8] : memref<1x1xf32, #tpu.memory_space<vmem>>, vector<1x1xf32>
    %c0_9 = arith.constant 0 : index
    %c0_10 = arith.constant 0 : index
    %5 = vector.load %arg7[%c0_9, %c0_10] : memref<1x8xf32, #tpu.memory_space<vmem>>, vector<1x8xf32>
    %c0_11 = arith.constant 0 : index
    %c0_12 = arith.constant 0 : index
    %c0_13 = arith.constant 0 : index
    %6 = vector.load %arg1[%c0_11, %c0_12, %c0_13] : memref<2x8x32xf32, #tpu.memory_space<vmem>>, vector<1x8x32xf32>
    %7 = vector.shape_cast %6 : vector<1x8x32xf32> to vector<8x32xf32>
    %8 = vector.broadcast %0 : vector<1x32xf32> to vector<8x32xf32>
    %9 = arith.addf %7, %8 : vector<8x32xf32>
    %cst = arith.constant 0.000000e+00 : f32
    %10 = vector.broadcast %cst : f32 to vector<8x32xf32>
    %11 = arith.maximumf %9, %10 : vector<8x32xf32>
    %c0_14 = arith.constant 0 : index
    %c0_15 = arith.constant 0 : index
    %12 = vector.load %arg9[%c0_14, %c0_15] : memref<16x32xf32, #tpu.memory_space<vmem>>, vector<8x32xf32>
    tpu.vector_store %arg9[%c0_14, %c0_15], %11 {strides = array<i32>} : memref<16x32xf32, #tpu.memory_space<vmem>>, vector<8x32xf32>,
    %c1 = arith.constant 1 : index
    %c0_16 = arith.constant 0 : index
    %c0_17 = arith.constant 0 : index
    %13 = vector.load %arg1[%c1, %c0_16, %c0_17] : memref<2x8x32xf32, #tpu.memory_space<vmem>>, vector<1x8x32xf32>
    %14 = vector.shape_cast %13 : vector<1x8x32xf32> to vector<8x32xf32>
    %15 = vector.broadcast %0 : vector<1x32xf32> to vector<8x32xf32>
    %16 = arith.addf %14, %15 : vector<8x32xf32>
    %cst_18 = arith.constant 0.000000e+00 : f32
    %17 = vector.broadcast %cst_18 : f32 to vector<8x32xf32>
    %18 = arith.maximumf %16, %17 : vector<8x32xf32>
    %c8 = arith.constant 8 : index
    %c0_19 = arith.constant 0 : index
    %19 = vector.load %arg9[%c8, %c0_19] : memref<16x32xf32, #tpu.memory_space<vmem>>, vector<8x32xf32>
    tpu.vector_store %arg9[%c8, %c0_19], %18 {strides = array<i32>} : memref<16x32xf32, #tpu.memory_space<vmem>>, vector<8x32xf32>,
    %c0_20 = arith.constant 0 : index
    %c0_21 = arith.constant 0 : index
    %20 = vector.load %arg9[%c0_20, %c0_21] : memref<16x32xf32, #tpu.memory_space<vmem>>, vector<16x32xf32>
    %cst_22 = arith.constant dense<0.000000e+00> : vector<16x32xf32>
    %21 = tpu.matmul %20, %1, %cst_22 {dimension_numbers = #tpu.dot_dimension_numbers<[1], [0], [0], [1], [0, 0, 1, 1], [], []>} : vector<16x32xf32>, vector<32x32xf32>, vector<16x32xf32> -> vector<16x32xf32>
    %22 = vector.broadcast %2 : vector<1x32xf32> to vector<16x32xf32>
    %23 = arith.addf %21, %22 : vector<16x32xf32>
    %cst_23 = arith.constant 0.000000e+00 : f32
    %24 = vector.broadcast %cst_23 : f32 to vector<16x32xf32>
    %25 = arith.maximumf %23, %24 : vector<16x32xf32>
    %26 = vector.extract_strided_slice %25 {offsets = [0, 0], sizes = [8, 32], strides = [1, 1]} : vector<16x32xf32> to vector<8x32xf32>
    %cst_24 = arith.constant dense<0.000000e+00> : vector<1x32xf32>
    %27 = tpu.matmul %5, %26, %cst_24 {dimension_numbers = #tpu.dot_dimension_numbers<[1], [0], [0], [1], [0, 0, 1, 1], [], []>} : vector<1x8xf32>, vector<8x32xf32>, vector<1x32xf32> -> vector<1x32xf32>
    %cst_25 = arith.constant dense<0.000000e+00> : vector<1x1xf32>
    %28 = tpu.matmul %27, %3, %cst_25 {dimension_numbers = #tpu.dot_dimension_numbers<[1], [0], [0], [1], [0, 0, 1, 1], [], []>} : vector<1x32xf32>, vector<32x1xf32>, vector<1x1xf32> -> vector<1x1xf32>
    %cst_26 = arith.constant 8.000000e+00 : f32
    %29 = vector.broadcast %cst_26 : f32 to vector<1x1xf32>
    %30 = arith.mulf %29, %4 : vector<1x1xf32>
    %31 = arith.addf %28, %30 : vector<1x1xf32>
    %c0_27 = arith.constant 0 : index
    %c0_28 = arith.constant 0 : index
    %32 = vector.load %arg8[%c0_27, %c0_28] : memref<2x1xf32, #tpu.memory_space<vmem>>, vector<1x1xf32>
    tpu.vector_store %arg8[%c0_27, %c0_28], %31 {strides = array<i32>} : memref<2x1xf32, #tpu.memory_space<vmem>>, vector<1x1xf32>,
    %33 = vector.extract_strided_slice %25 {offsets = [8, 0], sizes = [8, 32], strides = [1, 1]} : vector<16x32xf32> to vector<8x32xf32>
    %cst_29 = arith.constant dense<0.000000e+00> : vector<1x32xf32>
    %34 = tpu.matmul %5, %33, %cst_29 {dimension_numbers = #tpu.dot_dimension_numbers<[1], [0], [0], [1], [0, 0, 1, 1], [], []>} : vector<1x8xf32>, vector<8x32xf32>, vector<1x32xf32> -> vector<1x32xf32>
    %cst_30 = arith.constant dense<0.000000e+00> : vector<1x1xf32>
    %35 = tpu.matmul %34, %3, %cst_30 {dimension_numbers = #tpu.dot_dimension_numbers<[1], [0], [0], [1], [0, 0, 1, 1], [], []>} : vector<1x32xf32>, vector<32x1xf32>, vector<1x1xf32> -> vector<1x1xf32>
    %cst_31 = arith.constant 8.000000e+00 : f32
    %36 = vector.broadcast %cst_31 : f32 to vector<1x1xf32>
    %37 = arith.mulf %36, %4 : vector<1x1xf32>
    %38 = arith.addf %35, %37 : vector<1x1xf32>
    %c1_32 = arith.constant 1 : index
    %c0_33 = arith.constant 0 : index
    %39 = vector.load %arg8[%c1_32, %c0_33] : memref<2x1xf32, #tpu.memory_space<vmem>>, vector<1x1xf32>
    tpu.vector_store %arg8[%c1_32, %c0_33], %38 {strides = array<i32>} : memref<2x1xf32, #tpu.memory_space<vmem>>, vector<1x1xf32>,
    return
  }
  func.func @transform_0(%arg0: i32) -> (i32, i32, i32) {
    %c0_i32 = arith.constant 0 : i32
    %c0_i32_0 = arith.constant 0 : i32
    %c0_i32_1 = arith.constant 0 : i32
    return %arg0, %c0_i32, %c0_i32_0 : i32, i32, i32
  }
  func.func @transform_1(%arg0: i32) -> (i32, i32) {
    %c0_i32 = arith.constant 0 : i32
    %c0_i32_0 = arith.constant 0 : i32
    %c0_i32_1 = arith.constant 0 : i32
    return %c0_i32, %c0_i32_0 : i32, i32
  }
  func.func @transform_2(%arg0: i32) -> (i32, i32) {
    %c0_i32 = arith.constant 0 : i32
    %c0_i32_0 = arith.constant 0 : i32
    %c0_i32_1 = arith.constant 0 : i32
    return %c0_i32, %c0_i32_0 : i32, i32
  }
  func.func @transform_3(%arg0: i32) -> (i32, i32) {
    %c0_i32 = arith.constant 0 : i32
    %c0_i32_0 = arith.constant 0 : i32
    %c0_i32_1 = arith.constant 0 : i32
    return %c0_i32, %c0_i32_0 : i32, i32
  }
  func.func @transform_4(%arg0: i32) -> (i32, i32) {
    %c0_i32 = arith.constant 0 : i32
    %c0_i32_0 = arith.constant 0 : i32
    %c0_i32_1 = arith.constant 0 : i32
    return %c0_i32, %c0_i32_0 : i32, i32
  }
  func.func @transform_5(%arg0: i32) -> (i32, i32) {
    %c0_i32 = arith.constant 0 : i32
    %c0_i32_0 = arith.constant 0 : i32
    %c0_i32_1 = arith.constant 0 : i32
    return %c0_i32, %c0_i32_0 : i32, i32
  }
  func.func @transform_6(%arg0: i32) -> (i32, i32) {
    %c0_i32 = arith.constant 0 : i32
    %c0_i32_0 = arith.constant 0 : i32
    %c0_i32_1 = arith.constant 0 : i32
    return %c0_i32, %c0_i32_0 : i32, i32
  }
  func.func @transform_7(%arg0: i32) -> (i32, i32) {
    %c0_i32 = arith.constant 0 : i32
    %c0_i32_0 = arith.constant 0 : i32
    return %arg0, %c0_i32 : i32, i32
  }
}

</mosaic_0001>

<llo_original>
// kernel: graph_actor_critic_forward.3
$region0: #{graph_actor_critic_forward.3}
  #allocation0 [shape = 'u32[]', space=smem, size = 0x4, offset = 0x4, fixed_abs, tag = 'smem constant byte address 0x4 - core index']
  #allocation1 [shape = 'u32[144,128]{1,0:T(1,128)}', space=vmem, size = 0x12000, scoped, tag = 'internal scratch']
  #allocation2 [shape = 'f32[64,32]{1,0:T(8,128)}', space=vmem, size = 0x8000, scoped, tag = 'scratch operand']
  #allocation3 [shape = 'f32[1,1]{1,0:T(1,128)S(1)}', space=vmem, size = 0x200, scoped, tag = 'scoped memory for graph_actor_critic_forward.3']
  %s0 = inlined_call_operand.vmem [shape: f32[2,16,32], index: 0, kind: input, shape index: {}]
  %s1 = inlined_call_operand.vmem [shape: f32[64,16], index: 1, kind: input, shape index: {}]
  %s2 = inlined_call_operand.vmem [shape: f32[1,32], index: 2, kind: input, shape index: {}]
  %s3 = inlined_call_operand.vmem [shape: f32[32,32], index: 3, kind: input, shape index: {}]
  %s4 = inlined_call_operand.vmem [shape: f32[1,32], index: 4, kind: input, shape index: {}]
  %s5 = inlined_call_operand.vmem [shape: f32[32,1], index: 5, kind: input, shape index: {}]
  %s6 = inlined_call_operand.<no memory space> [shape: f32[1,1], index: 6, kind: input, shape index: {}]
  %s7 = inlined_call_operand.vmem [shape: f32[8,64], index: 7, kind: input, shape index: {}]
  %s8 = inlined_call_operand.vmem [shape: f32[16,1], index: 8, kind: output, shape index: {}]
  %s9 = sld [smem:[#allocation0]]
  $region65: #{graph_actor_critic_forward.3} parent=0
    _
  %s11 = ssub.s32 1, %s9
  %s12 = scalar_select 0, %s11, %s9
  %v13 = vstv %s6
  %14 = vst [vmem:[#allocation3] sm:$0x1] %v13
  loop: start=0, step=1, limit=4
  $region2: #{graph_actor_critic_forward.3} parent=0 // loop_pre_header
    _
  $region3: #{graph_actor_critic_forward.3} parent=0 // loop_header
    %s16 = sphi 0, %s20
    %p17 = scmp.ge.s32.totalorder %s16, 4
    %s26 = sphi 0, %s28
    %s29 = sphi 0, %s26
    %s30 = sphi 0, %s29
    %s46 = sphi 0, %s30
    %s50 = sphi 0, %s50
    %s52 = sphi 0, %s50
    %s53 = sphi 0, %s52
    %s67 = sphi 0, %s53
    %s71 = sphi 0, %s71
    %s73 = sphi 0, %s71
    %s74 = sphi 0, %s73
    %s88 = sphi 0, %s74
    %s92 = sphi 0, %s92
    %s94 = sphi 0, %s92
    %s95 = sphi 0, %s94
    %s109 = sphi 0, %s95
    %s113 = sphi 0, %s113
    %s115 = sphi 0, %s113
    %s116 = sphi 0, %s115
    %s130 = sphi 0, %s116
    %s134 = sphi 0, %s134
    %s136 = sphi 0, %s134
    %s137 = sphi 0, %s136
    %s151 = sphi 0, %s137
    %s155 = sphi 0, %s155
    %s157 = sphi 0, %s155
    %s158 = sphi 0, %s157
    %s172 = sphi 0, %s158
    %s176 = sphi 0, %s176
    %s178 = sphi 0, %s176
    %s179 = sphi 0, %s178
    %s193 = sphi 0, %s179
    %s199 = sphi 0, %s201
    %s202 = sphi 0, %s199
    %s203 = sphi 0, %s202
    %s219 = sphi 0, %s203
  $region4: #{graph_actor_critic_forward.3} parent=0 // loop_header_branch
    %19 = sbr.rel (%p17) target = $region8
  $region5: #{graph_actor_critic_forward.3} parent=0 // loop_body
    %s21 = ssub.s32 %s16, 1
    %s22 = ssub.s32 %s16, 2
    %s23 = sadd.s32 %s16, 1
    %s24 = ssub.s32 %s16, %s23
    %p25 = scmp.eq.s32.totalorder %s24, 0
    %s27 = sadd.s32 %s26, 1
    %s28 = scalar_select %p25, %s26, %s27
    %p31 = pneg %p25
    %p32 = scmp.eq.s32.totalorder %s16, 1
    %p33 = por %p31, %p32
    %p34 = scmp.ne.s32.totalorder %s26, %s29
    %p35 = scmp.eq.s32.totalorder %s16, 0
    %p36 = por %p34, %p35
    %p37 = scmp.ne.s32.totalorder %s26, %s29
    %p38 = scmp.eq.s32.totalorder %s21, 1
    %p39 = por %p37, %p38
    %p40 = scmp.ne.s32.totalorder %s29, %s30
    %p41 = scmp.eq.s32.totalorder %s21, 0
    %p42 = por %p40, %p41
    %p43 = scmp.ne.s32.totalorder %s29, %s30
    %p44 = scmp.eq.s32.totalorder %s22, 1
    %p45 = por %p43, %p44
    %p47 = scmp.ne.s32.totalorder %s30, %s46
    %p48 = scmp.eq.s32.totalorder %s22, 0
    %p49 = por %p47, %p48
    %s51 = sadd.s32 %s50, 1
    %p54 = scmp.eq.s32.totalorder %s16, 1
    %p55 = scmp.ne.s32.totalorder %s50, %s52
    %p56 = scmp.eq.s32.totalorder %s16, 0
    %p57 = por %p55, %p56
    %p58 = scmp.ne.s32.totalorder %s50, %s52
    %p59 = scmp.eq.s32.totalorder %s21, 1
    %p60 = por %p58, %p59
    %p61 = scmp.ne.s32.totalorder %s52, %s53
    %p62 = scmp.eq.s32.totalorder %s21, 0
    %p63 = por %p61, %p62
    %p64 = scmp.ne.s32.totalorder %s52, %s53
    %p65 = scmp.eq.s32.totalorder %s22, 1
    %p66 = por %p64, %p65
    %p68 = scmp.ne.s32.totalorder %s53, %s67
    %p69 = scmp.eq.s32.totalorder %s22, 0
    %p70 = por %p68, %p69
    %s72 = sadd.s32 %s71, 1
    %p75 = scmp.eq.s32.totalorder %s16, 1
    %p76 = scmp.ne.s32.totalorder %s71, %s73
    %p77 = scmp.eq.s32.totalorder %s16, 0
    %p78 = por %p76, %p77
    %p79 = scmp.ne.s32.totalorder %s71, %s73
    %p80 = scmp.eq.s32.totalorder %s21, 1
    %p81 = por %p79, %p80
    %p82 = scmp.ne.s32.totalorder %s73, %s74
    %p83 = scmp.eq.s32.totalorder %s21, 0
    %p84 = por %p82, %p83
    %p85 = scmp.ne.s32.totalorder %s73, %s74
    %p86 = scmp.eq.s32.totalorder %s22, 1
    %p87 = por %p85, %p86
    %p89 = scmp.ne.s32.totalorder %s74, %s88
    %p90 = scmp.eq.s32.totalorder %s22, 0
    %p91 = por %p89, %p90
    %s93 = sadd.s32 %s92, 1
    %p96 = scmp.eq.s32.totalorder %s16, 1
    %p97 = scmp.ne.s32.totalorder %s92, %s94
    %p98 = scmp.eq.s32.totalorder %s16, 0
    %p99 = por %p97, %p98
    %p100 = scmp.ne.s32.totalorder %s92, %s94
    %p101 = scmp.eq.s32.totalorder %s21, 1
    %p102 = por %p100, %p101
    %p103 = scmp.ne.s32.totalorder %s94, %s95
    %p104 = scmp.eq.s32.totalorder %s21, 0
    %p105 = por %p103, %p104
    %p106 = scmp.ne.s32.totalorder %s94, %s95
    %p107 = scmp.eq.s32.totalorder %s22, 1
    %p108 = por %p106, %p107
    %p110 = scmp.ne.s32.totalorder %s95, %s109
    %p111 = scmp.eq.s32.totalorder %s22, 0
    %p112 = por %p110, %p111
    %s114 = sadd.s32 %s113, 1
    %p117 = scmp.eq.s32.totalorder %s16, 1
    %p118 = scmp.ne.s32.totalorder %s113, %s115
    %p119 = scmp.eq.s32.totalorder %s16, 0
    %p120 = por %p118, %p119
    %p121 = scmp.ne.s32.totalorder %s113, %s115
    %p122 = scmp.eq.s32.totalorder %s21, 1
    %p123 = por %p121, %p122
    %p124 = scmp.ne.s32.totalorder %s115, %s116
    %p125 = scmp.eq.s32.totalorder %s21, 0
    %p126 = por %p124, %p125
    %p127 = scmp.ne.s32.totalorder %s115, %s116
    %p128 = scmp.eq.s32.totalorder %s22, 1
    %p129 = por %p127, %p128
    %p131 = scmp.ne.s32.totalorder %s116, %s130
    %p132 = scmp.eq.s32.totalorder %s22, 0
    %p133 = por %p131, %p132
    %s135 = sadd.s32 %s134, 1
    %p138 = scmp.eq.s32.totalorder %s16, 1
    %p139 = scmp.ne.s32.totalorder %s134, %s136
    %p140 = scmp.eq.s32.totalorder %s16, 0
    %p141 = por %p139, %p140
    %p142 = scmp.ne.s32.totalorder %s134, %s136
    %p143 = scmp.eq.s32.totalorder %s21, 1
    %p144 = por %p142, %p143
    %p145 = scmp.ne.s32.totalorder %s136, %s137
    %p146 = scmp.eq.s32.totalorder %s21, 0
    %p147 = por %p145, %p146
    %p148 = scmp.ne.s32.totalorder %s136, %s137
    %p149 = scmp.eq.s32.totalorder %s22, 1
    %p150 = por %p148, %p149
    %p152 = scmp.ne.s32.totalorder %s137, %s151
    %p153 = scmp.eq.s32.totalorder %s22, 0
    %p154 = por %p152, %p153
    %s156 = sadd.s32 %s155, 1
    %p159 = scmp.eq.s32.totalorder %s16, 1
    %p160 = scmp.ne.s32.totalorder %s155, %s157
    %p161 = scmp.eq.s32.totalorder %s16, 0
    %p162 = por %p160, %p161
    %p163 = scmp.ne.s32.totalorder %s155, %s157
    %p164 = scmp.eq.s32.totalorder %s21, 1
    %p165 = por %p163, %p164
    %p166 = scmp.ne.s32.totalorder %s157, %s158
    %p167 = scmp.eq.s32.totalorder %s21, 0
    %p168 = por %p166, %p167
    %p169 = scmp.ne.s32.totalorder %s157, %s158
    %p170 = scmp.eq.s32.totalorder %s22, 1
    %p171 = por %p169, %p170
    %p173 = scmp.ne.s32.totalorder %s158, %s172
    %p174 = scmp.eq.s32.totalorder %s22, 0
    %p175 = por %p173, %p174
    %s177 = sadd.s32 %s176, 1
    %p180 = scmp.eq.s32.totalorder %s16, 1
    %p181 = scmp.ne.s32.totalorder %s176, %s178
    %p182 = scmp.eq.s32.totalorder %s16, 0
    %p183 = por %p181, %p182
    %p184 = scmp.ne.s32.totalorder %s176, %s178
    %p185 = scmp.eq.s32.totalorder %s21, 1
    %p186 = por %p184, %p185
    %p187 = scmp.ne.s32.totalorder %s178, %s179
    %p188 = scmp.eq.s32.totalorder %s21, 0
    %p189 = por %p187, %p188
    %p190 = scmp.ne.s32.totalorder %s178, %s179
    %p191 = scmp.eq.s32.totalorder %s22, 1
    %p192 = por %p190, %p191
    %p194 = scmp.ne.s32.totalorder %s179, %s193
    %p195 = scmp.eq.s32.totalorder %s22, 0
    %p196 = por %p194, %p195
    %s197 = ssub.s32 %s16, %s23
    %p198 = scmp.eq.s32.totalorder %s197, 0
    %s200 = sadd.s32 %s199, 1
    %s201 = scalar_select %p198, %s199, %s200
    %p204 = pneg %p198
    %p205 = scmp.eq.s32.totalorder %s16, 1
    %p206 = por %p204, %p205
    %p207 = scmp.ne.s32.totalorder %s199, %s202
    %p208 = scmp.eq.s32.totalorder %s16, 0
    %p209 = por %p207, %p208
    %p210 = scmp.ne.s32.totalorder %s199, %s202
    %p211 = scmp.eq.s32.totalorder %s21, 1
    %p212 = por %p210, %p211
    %p213 = scmp.ne.s32.totalorder %s202, %s203
    %p214 = scmp.eq.s32.totalorder %s21, 0
    %p215 = por %p213, %p214
    %p216 = scmp.ne.s32.totalorder %s202, %s203
    %p217 = scmp.eq.s32.totalorder %s22, 1
    %p218 = por %p216, %p217
    %p220 = scmp.ne.s32.totalorder %s203, %s219
    %p221 = scmp.eq.s32.totalorder %s22, 0
    %p222 = por %p220, %p221
    %p223 = scmp.le.s32.totalorder 1, %s16
    %p224 = scmp.lt.s32.totalorder %s16, 3
    %p225 = pnand %p223, %p224
    %p226 = pneg %p225
    // Predicated region
    $region9: #{graph_actor_critic_forward.3} parent=5 // pred_check
      _
    $region10: #{graph_actor_critic_forward.3} parent=5 // pred_check_branch
      %228 = sbr.rel (%p225) target = $region12
    $region11: #{graph_actor_critic_forward.3} parent=5 // pred_region
      %s229 = ssub.s32 %s16, 1
      // Predicated region
      $region13: #{graph_actor_critic_forward.3} parent=11 // pred_check
        %p230 = pneg %p63
      $region14: #{graph_actor_critic_forward.3} parent=11 // pred_check_branch
        %232 = sbr.rel (%p230) target = $region16
      $region15: #{graph_actor_critic_forward.3} parent=11 // pred_region
        _
      $region16: #{graph_actor_critic_forward.3} parent=11 // pred_fallthru
        _
      // Predicated region
      $region17: #{graph_actor_critic_forward.3} parent=11 // pred_check
        %p233 = pneg %p84
      $region18: #{graph_actor_critic_forward.3} parent=11 // pred_check_branch
        %235 = sbr.rel (%p233) target = $region20
      $region19: #{graph_actor_critic_forward.3} parent=11 // pred_region
        _
      $region20: #{graph_actor_critic_forward.3} parent=11 // pred_fallthru
        _
      // Predicated region
      $region21: #{graph_actor_critic_forward.3} parent=11 // pred_check
        %p236 = pneg %p105
      $region22: #{graph_actor_critic_forward.3} parent=11 // pred_check_branch
        %238 = sbr.rel (%p236) target = $region24
      $region23: #{graph_actor_critic_forward.3} parent=11 // pred_region
        _
      $region24: #{graph_actor_critic_forward.3} parent=11 // pred_fallthru
        _
      // Predicated region
      $region25: #{graph_actor_critic_forward.3} parent=11 // pred_check
        %p239 = pneg %p126
      $region26: #{graph_actor_critic_forward.3} parent=11 // pred_check_branch
        %241 = sbr.rel (%p239) target = $region28
      $region27: #{graph_actor_critic_forward.3} parent=11 // pred_region
        _
      $region28: #{graph_actor_critic_forward.3} parent=11 // pred_fallthru
        _
      // Predicated region
      $region29: #{graph_actor_critic_forward.3} parent=11 // pred_check
        %p242 = pneg %p147
      $region30: #{graph_actor_critic_forward.3} parent=11 // pred_check_branch
        %244 = sbr.rel (%p242) target = $region32
      $region31: #{graph_actor_critic_forward.3} parent=11 // pred_region
        _
      $region32: #{graph_actor_critic_forward.3} parent=11 // pred_fallthru
        _
      // Predicated region
      $region33: #{graph_actor_critic_forward.3} parent=11 // pred_check
        %p245 = pneg %p168
      $region34: #{graph_actor_critic_forward.3} parent=11 // pred_check_branch
        %247 = sbr.rel (%p245) target = $region36
      $region35: #{graph_actor_critic_forward.3} parent=11 // pred_region
        _
      $region36: #{graph_actor_critic_forward.3} parent=11 // pred_fallthru
        _
      // Predicated region
      $region37: #{graph_actor_critic_forward.3} parent=11 // pred_check
        %p248 = pneg %p189
      $region38: #{graph_actor_critic_forward.3} parent=11 // pred_check_branch
        %250 = sbr.rel (%p248) target = $region40
      $region39: #{graph_actor_critic_forward.3} parent=11 // pred_region
        _
      $region40: #{graph_actor_critic_forward.3} parent=11 // pred_fallthru
        _
    $region12: #{graph_actor_critic_forward.3} parent=5 // pred_fallthru
      _
    %p251 = scmp.lt.s32.totalorder %s16, 2
    // Predicated region
    $region41: #{graph_actor_critic_forward.3} parent=5 // pred_check
      %p252 = pneg %p251
    $region42: #{graph_actor_critic_forward.3} parent=5 // pred_check_branch
      %254 = sbr.rel (%p252) target = $region44
    $region43: #{graph_actor_critic_forward.3} parent=5 // pred_region
      // Predicated region
      $region45: #{graph_actor_critic_forward.3} parent=43 // pred_check
        %p255 = pneg %p36
      $region46: #{graph_actor_critic_forward.3} parent=43 // pred_check_branch
        %257 = sbr.rel (%p255) target = $region48
      $region47: #{graph_actor_critic_forward.3} parent=43 // pred_region
        %p258 = scmp.lt.s32.totalorder %s16, 1
        %s259 = scalar_select %p258, %s16, 1
        %s260 = smul.addr %s259, 2
        %s261 = smul.addr %s260, 8
        %s262 = scalar_lea.vmem %s0, %s261
      $region48: #{graph_actor_critic_forward.3} parent=43 // pred_fallthru
        _
    $region44: #{graph_actor_critic_forward.3} parent=5 // pred_fallthru
      _
    %p263 = scmp.le.s32.totalorder 1, %s16
    %p264 = scmp.lt.s32.totalorder %s16, 3
    %p265 = pnand %p263, %p264
    %p266 = pneg %p265
    // Predicated region
    $region49: #{graph_actor_critic_forward.3} parent=5 // pred_check
      _
    $region50: #{graph_actor_critic_forward.3} parent=5 // pred_check_branch
      %268 = sbr.rel (%p265) target = $region52
    $region51: #{graph_actor_critic_forward.3} parent=5 // pred_region
      %s269 = ssub.s32 %s16, 1
      %p270 = scmp.lt.s32.totalorder %s21, 1
      %s271 = scalar_select %p270, %s21, 1
      %s272 = smul.addr %s271, 2
      %s273 = smul.addr %s272, 8
      %s274 = scalar_lea.vmem %s0, %s273
      %p275 = pneg %p42
      %p276 = pneg %p39
      %p277 = pneg %p63
      %p278 = pneg %p60
      %p279 = pneg %p84
      %p280 = pneg %p81
      %p281 = pneg %p105
      %p282 = pneg %p102
      %p283 = pneg %p126
      %p284 = pneg %p123
      %p285 = pneg %p147
      %p286 = pneg %p144
      %p287 = pneg %p168
      %p288 = pneg %p165
      %p289 = pneg %p189
      %p290 = pneg %p186
      %p291 = pneg %p215
      %p292 = pneg %p212
      %p293 = scmp.lt.s32.totalorder %s21, 1
      %s294 = scalar_select %p293, %s21, 1
      %s295 = smul.addr %s294, 8
      %s296 = scalar_lea.vmem %s8, %s295
      %p297 = scmp.lt.s32.totalorder %s21, 1
      %s298 = scalar_select %p297, %s21, 1
      %s299 = smul.addr %s298, 2
      %s300 = smul.addr %s299, 8
      %s301 = scalar_lea.vmem %s0, %s300
      %p302 = scmp.lt.s32.totalorder %s21, 1
      %s303 = scalar_select %p302, %s21, 1
      %s304 = smul.addr %s303, 8
      %s305 = scalar_lea.vmem %s8, %s304
      %v306 = vld [vmem:[%s1] sm:$0xff]
      %v307 = vld [vmem:[%s1 + $0x8] sm:$0xff]
      %v308 = vld [vmem:[%s1 + $0x10] sm:$0xff]
      %v309 = vld [vmem:[%s1 + $0x18] sm:$0xff]
      %v310 = vld [vmem:[%s1 + $0x20] sm:$0xff]
      %v311 = vld [vmem:[%s1 + $0x28] sm:$0xff]
      %v312 = vld [vmem:[%s1 + $0x30] sm:$0xff]
      %v313 = vld [vmem:[%s1 + $0x38] sm:$0xff]
      %v314 = vld [vmem:[%s2] sm:$0x1]
      %v315 = vld [vmem:[%s3] sm:$0xff]
      %v316 = vld [vmem:[%s3 + $0x8] sm:$0xff]
      %v317 = vld [vmem:[%s3 + $0x10] sm:$0xff]
      %v318 = vld [vmem:[%s3 + $0x18] sm:$0xff]
      %v319 = vld [vmem:[%s4] sm:$0x1]
      %v320 = vld [vmem:[%s5] sm:$0xff]
      %v321 = vld [vmem:[%s5 + $0x8] sm:$0xff]
      %v322 = vld [vmem:[%s5 + $0x10] sm:$0xff]
      %v323 = vld [vmem:[%s5 + $0x18] sm:$0xff]
      %v324 = vld [vmem:[#allocation3] sm:$0x1]
      %v325 = vld [vmem:[%s7] sm:$0xff]
      %v326 = vld [vmem:[%s301] sm:$0xff]
      %v327 = vld [vmem:[%s301 + $0x8] sm:$0xff]
      %v329 = vlaneseq
      %v330 = vshrl.u32 %v329, 7
      %v331 = vsub.s32 0, %v330
      %v332 = vrot.slane %v314, %v331
      %vm334 = vcmask 130048
      %v336 = vsel %vm334, %v306, 0
      %v339 = vsel %vm334, %v307, 0
      %v342 = vsel %vm334, %v308, 0
      %v345 = vsel %vm334, %v309, 0
      %v348 = vsel %vm334, %v310, 0
      %v351 = vsel %vm334, %v311, 0
      %v354 = vsel %vm334, %v312, 0
      %v357 = vsel %vm334, %v313, 0
      %359 = vmatprep.subr.mxu0 0.0
      %360 = vmatpush1.msra.mxu0 %v326
      %361 = vmatprep.subr.mxu0 0.0
      %362 = vmatpush1.msra.mxu0 %v327
      %363 = vmatprep.subr.mxu0 0.0
      %364 = vmatpush1.msra.mxu0 0.0
      %365 = vmatprep.subr.mxu0 0.0
      %366 = vmatpush1.msra.mxu0 0.0
      %367 = vmatprep.subr.mxu0 0.0
      %368 = vmatpush1.msra.mxu0 0.0
      %369 = vmatprep.subr.mxu0 0.0
      %370 = vmatpush1.msra.mxu0 0.0
      %371 = vmatprep.subr.mxu0 0.0
      %372 = vmatpush1.msra.mxu0 0.0
      %373 = vmatprep.subr.mxu0 0.0
      %374 = vmatpush1.msra.mxu0 0.0
      %375 = vmatprep.subr.mxu0 0.0
      %376 = vmatpush1.msra.mxu0 0.0
      %377 = vmatprep.subr.mxu0 0.0
      %378 = vmatpush1.msra.mxu0 0.0
      %379 = vmatprep.subr.mxu0 0.0
      %380 = vmatpush1.msra.mxu0 0.0
      %381 = vmatprep.subr.mxu0 0.0
      %382 = vmatpush1.msra.mxu0 0.0
      %383 = vmatprep.subr.mxu0 0.0
      %384 = vmatpush1.msra.mxu0 0.0
      %385 = vmatprep.subr.mxu0 0.0
      %386 = vmatpush1.msra.mxu0 0.0
      %387 = vmatprep.subr.mxu0 0.0
      %388 = vmatpush1.msra.mxu0 0.0
      %389 = vmatprep.subr.mxu0 0.0
      %390 = vmatpush1.msra.mxu0 0.0
      %391 = vmatprep.subr.mxu0 0.0
      %392 = vmatpush1.msra.mxu0 0.0
      %393 = vmatprep.subr.mxu0 0.0
      %394 = vmatpush1.msra.mxu0 0.0
      %395 = vmatprep.subr.mxu0 0.0
      %396 = vmatpush1.msra.mxu0 0.0
      %397 = vmatprep.subr.mxu0 0.0
      %398 = vmatpush1.msra.mxu0 0.0
      %399 = vmatprep.subr.mxu0 0.0
      %400 = vmatpush1.msra.mxu0 0.0
      %401 = vmatprep.subr.mxu0 0.0
      %402 = vmatpush1.msra.mxu0 0.0
      %403 = vmatprep.subr.mxu0 0.0
      %404 = vmatpush1.msra.mxu0 0.0
      %405 = vmatprep.subr.mxu0 0.0
      %406 = vmatpush1.msra.mxu0 0.0
      %407 = vmatprep.subr.mxu0 0.0
      %408 = vmatpush1.msra.mxu0 0.0
      %409 = vmatprep.subr.mxu0 0.0
      %410 = vmatpush1.msra.mxu0 0.0
      %411 = vmatprep.subr.mxu0 0.0
      %412 = vmatpush1.msra.mxu0 0.0
      %413 = vmatprep.subr.mxu0 0.0
      %414 = vmatpush1.msra.mxu0 0.0
      %415 = vmatprep.subr.mxu0 0.0
      %416 = vmatpush1.msra.mxu0 0.0
      %417 = vmatprep.subr.mxu0 0.0
      %418 = vmatpush1.msra.mxu0 0.0
      %419 = vmatprep.subr.mxu0 0.0
      %420 = vmatpush1.msra.mxu0 0.0
      %421 = vmatprep.subr.mxu0 0.0
      %422 = vmatpush1.msra.mxu0 0.0
      %423 = vmatprep.mubr.f32.mxu0 0.0
      %424 = vmatmul.mubr.f32.gmra.mrb[0].mxu0 %v336
      %v425 = vpop.f32.mrb[0].mxu0
      %v426 = vadd.f32 %v332, %v425
      %v427 = vpop.f32.mrb[0].mxu0
      %428 = vmatprep.mubr.f32.mxu0 0.0
      %429 = vmatmul.mubr.f32.gmra.mrb[0].mxu0 %v339
      %v430 = vpop.f32.mrb[0].mxu0
      %v431 = vadd.f32 %v332, %v430
      %v432 = vpop.f32.mrb[0].mxu0
      %433 = vmatprep.mubr.f32.mxu0 0.0
      %434 = vmatmul.mubr.f32.gmra.mrb[0].mxu0 %v342
      %v435 = vpop.f32.mrb[0].mxu0
      %v436 = vadd.f32 %v332, %v435
      %v437 = vpop.f32.mrb[0].mxu0
      %438 = vmatprep.mubr.f32.mxu0 0.0
      %439 = vmatmul.mubr.f32.gmra.mrb[0].mxu0 %v345
      %v440 = vpop.f32.mrb[0].mxu0
      %v441 = vadd.f32 %v332, %v440
      %v442 = vpop.f32.mrb[0].mxu0
      %443 = vmatprep.mubr.f32.mxu0 0.0
      %444 = vmatmul.mubr.f32.gmra.mrb[0].mxu0 %v348
      %v445 = vpop.f32.mrb[0].mxu0
      %v446 = vadd.f32 %v332, %v445
      %v447 = vpop.f32.mrb[0].mxu0
      %448 = vmatprep.mubr.f32.mxu0 0.0
      %449 = vmatmul.mubr.f32.gmra.mrb[0].mxu0 %v351
      %v450 = vpop.f32.mrb[0].mxu0
      %v451 = vadd.f32 %v332, %v450
      %v452 = vpop.f32.mrb[0].mxu0
      %453 = vmatprep.mubr.f32.mxu0 0.0
      %454 = vmatmul.mubr.f32.gmra.mrb[0].mxu0 %v354
      %v455 = vpop.f32.mrb[0].mxu0
      %v456 = vadd.f32 %v332, %v455
      %v457 = vpop.f32.mrb[0].mxu0
      %458 = vmatprep.mubr.f32.mxu0 0.0
      %459 = vmatmul.mubr.f32.gmra.mrb[0].mxu0 %v357
      %v460 = vpop.f32.mrb[0].mxu0
      %v461 = vadd.f32 %v332, %v460
      %v462 = vpop.f32.mrb[0].mxu0
      %463 = vdwg.mxu0
      %v464 = vmax.f32 %v426, 0.0
      %v465 = vmax.f32 %v431, 0.0
      %v466 = vmax.f32 %v436, 0.0
      %v467 = vmax.f32 %v441, 0.0
      %v468 = vmax.f32 %v446, 0.0
      %v469 = vmax.f32 %v451, 0.0
      %v470 = vmax.f32 %v456, 0.0
      %v471 = vmax.f32 %v461, 0.0
      %vm472 = vcmask 261120
      %473 = vst.msk [vmem:[#allocation2] sm:$0xff] %vm472, %v464
      %474 = vst.msk [vmem:[#allocation2 + $0x8] sm:$0xff] %vm472, %v465
      %475 = vst.msk [vmem:[#allocation2 + $0x10] sm:$0xff] %vm472, %v466
      %476 = vst.msk [vmem:[#allocation2 + $0x18] sm:$0xff] %vm472, %v467
      %477 = vst.msk [vmem:[#allocation2 + $0x20] sm:$0xff] %vm472, %v468
      %478 = vst.msk [vmem:[#allocation2 + $0x28] sm:$0xff] %vm472, %v469
      %479 = vst.msk [vmem:[#allocation2 + $0x30] sm:$0xff] %vm472, %v470
      %480 = vst.msk [vmem:[#allocation2 + $0x38] sm:$0xff] %vm472, %v471
      %v481 = vld [vmem:[#allocation2] sm:$0xff]
      %v482 = vld [vmem:[#allocation2 + $0x8] sm:$0xff]
      %v483 = vld [vmem:[#allocation2 + $0x10] sm:$0xff]
      %v484 = vld [vmem:[#allocation2 + $0x18] sm:$0xff]
      %v485 = vld [vmem:[#allocation2 + $0x20] sm:$0xff]
      %v486 = vld [vmem:[#allocation2 + $0x28] sm:$0xff]
      %v487 = vld [vmem:[#allocation2 + $0x30] sm:$0xff]
      %v488 = vld [vmem:[#allocation2 + $0x38] sm:$0xff]
      %v490 = vlaneseq
      %v491 = vshrl.u32 %v490, 7
      %v492 = vsub.s32 0, %v491
      %v493 = vrot.slane %v319, %v492
      %v496 = vsel %vm472, %v481, 0
      %v499 = vsel %vm472, %v482, 0
      %v502 = vsel %vm472, %v483, 0
      %v505 = vsel %vm472, %v484, 0
      %v508 = vsel %vm472, %v485, 0
      %v511 = vsel %vm472, %v486, 0
      %v514 = vsel %vm472, %v487, 0
      %v517 = vsel %vm472, %v488, 0
      %519 = vmatprep.subr.mxu0 0.0
      %520 = vmatpush1.msra.mxu0 %v315
      %521 = vmatprep.subr.mxu0 0.0
      %522 = vmatpush1.msra.mxu0 %v316
      %523 = vmatprep.subr.mxu0 0.0
      %524 = vmatpush1.msra.mxu0 %v317
      %525 = vmatprep.subr.mxu0 0.0
      %526 = vmatpush1.msra.mxu0 %v318
      %527 = vmatprep.subr.mxu0 0.0
      %528 = vmatpush1.msra.mxu0 0.0
      %529 = vmatprep.subr.mxu0 0.0
      %530 = vmatpush1.msra.mxu0 0.0
      %531 = vmatprep.subr.mxu0 0.0
      %532 = vmatpush1.msra.mxu0 0.0
      %533 = vmatprep.subr.mxu0 0.0
      %534 = vmatpush1.msra.mxu0 0.0
      %535 = vmatprep.subr.mxu0 0.0
      %536 = vmatpush1.msra.mxu0 0.0
      %537 = vmatprep.subr.mxu0 0.0
      %538 = vmatpush1.msra.mxu0 0.0
      %539 = vmatprep.subr.mxu0 0.0
      %540 = vmatpush1.msra.mxu0 0.0
      %541 = vmatprep.subr.mxu0 0.0
      %542 = vmatpush1.msra.mxu0 0.0
      %543 = vmatprep.subr.mxu0 0.0
      %544 = vmatpush1.msra.mxu0 0.0
      %545 = vmatprep.subr.mxu0 0.0
      %546 = vmatpush1.msra.mxu0 0.0
      %547 = vmatprep.subr.mxu0 0.0
      %548 = vmatpush1.msra.mxu0 0.0
      %549 = vmatprep.subr.mxu0 0.0
      %550 = vmatpush1.msra.mxu0 0.0
      %551 = vmatprep.subr.mxu0 0.0
      %552 = vmatpush1.msra.mxu0 0.0
      %553 = vmatprep.subr.mxu0 0.0
      %554 = vmatpush1.msra.mxu0 0.0
      %555 = vmatprep.subr.mxu0 0.0
      %556 = vmatpush1.msra.mxu0 0.0
      %557 = vmatprep.subr.mxu0 0.0
      %558 = vmatpush1.msra.mxu0 0.0
      %559 = vmatprep.subr.mxu0 0.0
      %560 = vmatpush1.msra.mxu0 0.0
      %561 = vmatprep.subr.mxu0 0.0
      %562 = vmatpush1.msra.mxu0 0.0
      %563 = vmatprep.subr.mxu0 0.0
      %564 = vmatpush1.msra.mxu0 0.0
      %565 = vmatprep.subr.mxu0 0.0
      %566 = vmatpush1.msra.mxu0 0.0
      %567 = vmatprep.subr.mxu0 0.0
      %568 = vmatpush1.msra.mxu0 0.0
      %569 = vmatprep.subr.mxu0 0.0
      %570 = vmatpush1.msra.mxu0 0.0
      %571 = vmatprep.subr.mxu0 0.0
      %572 = vmatpush1.msra.mxu0 0.0
      %573 = vmatprep.subr.mxu0 0.0
      %574 = vmatpush1.msra.mxu0 0.0
      %575 = vmatprep.subr.mxu0 0.0
      %576 = vmatpush1.msra.mxu0 0.0
      %577 = vmatprep.subr.mxu0 0.0
      %578 = vmatpush1.msra.mxu0 0.0
      %579 = vmatprep.subr.mxu0 0.0
      %580 = vmatpush1.msra.mxu0 0.0
      %581 = vmatprep.subr.mxu0 0.0
      %582 = vmatpush1.msra.mxu0 0.0
      %583 = vmatprep.mubr.f32.mxu0 0.0
      %584 = vmatmul.mubr.f32.gmra.mrb[0].mxu0 %v496
      %v585 = vpop.f32.mrb[0].mxu0
      %v586 = vadd.f32 %v493, %v585
      %v587 = vpop.f32.mrb[0].mxu0
      %588 = vmatprep.mubr.f32.mxu0 0.0
      %589 = vmatmul.mubr.f32.gmra.mrb[0].mxu0 %v499
      %v590 = vpop.f32.mrb[0].mxu0
      %v591 = vadd.f32 %v493, %v590
      %v592 = vpop.f32.mrb[0].mxu0
      %593 = vmatprep.mubr.f32.mxu0 0.0
      %594 = vmatmul.mubr.f32.gmra.mrb[0].mxu0 %v502
      %v595 = vpop.f32.mrb[0].mxu0
      %v596 = vadd.f32 %v493, %v595
      %v597 = vpop.f32.mrb[0].mxu0
      %598 = vmatprep.mubr.f32.mxu0 0.0
      %599 = vmatmul.mubr.f32.gmra.mrb[0].mxu0 %v505
      %v600 = vpop.f32.mrb[0].mxu0
      %v601 = vadd.f32 %v493, %v600
      %v602 = vpop.f32.mrb[0].mxu0
      %603 = vmatprep.mubr.f32.mxu0 0.0
      %604 = vmatmul.mubr.f32.gmra.mrb[0].mxu0 %v508
      %v605 = vpop.f32.mrb[0].mxu0
      %v606 = vadd.f32 %v493, %v605
      %v607 = vpop.f32.mrb[0].mxu0
      %608 = vmatprep.mubr.f32.mxu0 0.0
      %609 = vmatmul.mubr.f32.gmra.mrb[0].mxu0 %v511
      %v610 = vpop.f32.mrb[0].mxu0
      %v611 = vadd.f32 %v493, %v610
      %v612 = vpop.f32.mrb[0].mxu0
      %613 = vmatprep.mubr.f32.mxu0 0.0
      %614 = vmatmul.mubr.f32.gmra.mrb[0].mxu0 %v514
      %v615 = vpop.f32.mrb[0].mxu0
      %v616 = vadd.f32 %v493, %v615
      %v617 = vpop.f32.mrb[0].mxu0
      %618 = vmatprep.mubr.f32.mxu0 0.0
      %619 = vmatmul.mubr.f32.gmra.mrb[0].mxu0 %v517
      %v620 = vpop.f32.mrb[0].mxu0
      %v621 = vadd.f32 %v493, %v620
      %v622 = vpop.f32.mrb[0].mxu0
      %623 = vdwg.mxu0
      %v624 = vmax.f32 %v586, 0.0
      %v625 = vmax.f32 %v591, 0.0
      %v626 = vmax.f32 %v596, 0.0
      %v627 = vmax.f32 %v601, 0.0
      %v628 = vmax.f32 %v606, 0.0
      %v629 = vmax.f32 %v611, 0.0
      %v630 = vmax.f32 %v616, 0.0
      %v631 = vmax.f32 %v621, 0.0
      %vm632 = vcmask 523264
      %v634 = vsel %vm632, %v325, 0
      %636 = vmatprep.subr.mxu0 0.0
      %637 = vmatpush1.msra.mxu0 %v624
      %638 = vmatprep.subr.mxu0 0.0
      %639 = vmatpush1.msra.mxu0 %v625
      %640 = vmatprep.subr.mxu0 0.0
      %641 = vmatpush1.msra.mxu0 %v626
      %642 = vmatprep.subr.mxu0 0.0
      %643 = vmatpush1.msra.mxu0 %v627
      %644 = vmatprep.subr.mxu0 0.0
      %645 = vmatpush1.msra.mxu0 %v628
      %646 = vmatprep.subr.mxu0 0.0
      %647 = vmatpush1.msra.mxu0 %v629
      %648 = vmatprep.subr.mxu0 0.0
      %649 = vmatpush1.msra.mxu0 %v630
      %650 = vmatprep.subr.mxu0 0.0
      %651 = vmatpush1.msra.mxu0 %v631
      %652 = vmatprep.subr.mxu0 0.0
      %653 = vmatpush1.msra.mxu0 0.0
      %654 = vmatprep.subr.mxu0 0.0
      %655 = vmatpush1.msra.mxu0 0.0
      %656 = vmatprep.subr.mxu0 0.0
      %657 = vmatpush1.msra.mxu0 0.0
      %658 = vmatprep.subr.mxu0 0.0
      %659 = vmatpush1.msra.mxu0 0.0
      %660 = vmatprep.subr.mxu0 0.0
      %661 = vmatpush1.msra.mxu0 0.0
      %662 = vmatprep.subr.mxu0 0.0
      %663 = vmatpush1.msra.mxu0 0.0
      %664 = vmatprep.subr.mxu0 0.0
      %665 = vmatpush1.msra.mxu0 0.0
      %666 = vmatprep.subr.mxu0 0.0
      %667 = vmatpush1.msra.mxu0 0.0
      %668 = vmatprep.subr.mxu0 0.0
      %669 = vmatpush1.msra.mxu0 0.0
      %670 = vmatprep.subr.mxu0 0.0
      %671 = vmatpush1.msra.mxu0 0.0
      %672 = vmatprep.subr.mxu0 0.0
      %673 = vmatpush1.msra.mxu0 0.0
      %674 = vmatprep.subr.mxu0 0.0
      %675 = vmatpush1.msra.mxu0 0.0
      %676 = vmatprep.subr.mxu0 0.0
      %677 = vmatpush1.msra.mxu0 0.0
      %678 = vmatprep.subr.mxu0 0.0
      %679 = vmatpush1.msra.mxu0 0.0
      %680 = vmatprep.subr.mxu0 0.0
      %681 = vmatpush1.msra.mxu0 0.0
      %682 = vmatprep.subr.mxu0 0.0
      %683 = vmatpush1.msra.mxu0 0.0
      %684 = vmatprep.subr.mxu0 0.0
      %685 = vmatpush1.msra.mxu0 0.0
      %686 = vmatprep.subr.mxu0 0.0
      %687 = vmatpush1.msra.mxu0 0.0
      %688 = vmatprep.subr.mxu0 0.0
      %689 = vmatpush1.msra.mxu0 0.0
      %690 = vmatprep.subr.mxu0 0.0
      %691 = vmatpush1.msra.mxu0 0.0
      %692 = vmatprep.subr.mxu0 0.0
      %693 = vmatpush1.msra.mxu0 0.0
      %694 = vmatprep.subr.mxu0 0.0
      %695 = vmatpush1.msra.mxu0 0.0
      %696 = vmatprep.subr.mxu0 0.0
      %697 = vmatpush1.msra.mxu0 0.0
      %698 = vmatprep.subr.mxu0 0.0
      %699 = vmatpush1.msra.mxu0 0.0
      %700 = vmatprep.mubr.f32.mxu0 0.0
      %701 = vmatmul.mubr.f32.gmra.mrb[0].mxu0 %v634
      %v702 = vpop.f32.mrb[0].mxu0
      %v703 = vadd.f32 0.0, %v702
      %v704 = vpop.f32.mrb[0].mxu0
      %705 = vdwg.mxu0
      %v706 = vmul.f32 %v324, 8.0
      %v708 = vlaneseq
      %v709 = vshrl.u32 %v708, 7
      %v710 = vsub.s32 0, %v709
      %v711 = vrot.slane %v706, %v710
      %v714 = vsel %vm472, %v703, 0
      %716 = vmatprep.subr.mxu0 0.0
      %717 = vmatpush1.msra.mxu0 %v320
      %718 = vmatprep.subr.mxu0 0.0
      %719 = vmatpush1.msra.mxu0 %v321
      %720 = vmatprep.subr.mxu0 0.0
      %721 = vmatpush1.msra.mxu0 %v322
      %722 = vmatprep.subr.mxu0 0.0
      %723 = vmatpush1.msra.mxu0 %v323
      %724 = vmatprep.subr.mxu0 0.0
      %725 = vmatpush1.msra.mxu0 0.0
      %726 = vmatprep.subr.mxu0 0.0
      %727 = vmatpush1.msra.mxu0 0.0
      %728 = vmatprep.subr.mxu0 0.0
      %729 = vmatpush1.msra.mxu0 0.0
      %730 = vmatprep.subr.mxu0 0.0
      %731 = vmatpush1.msra.mxu0 0.0
      %732 = vmatprep.subr.mxu0 0.0
      %733 = vmatpush1.msra.mxu0 0.0
      %734 = vmatprep.subr.mxu0 0.0
      %735 = vmatpush1.msra.mxu0 0.0
      %736 = vmatprep.subr.mxu0 0.0
      %737 = vmatpush1.msra.mxu0 0.0
      %738 = vmatprep.subr.mxu0 0.0
      %739 = vmatpush1.msra.mxu0 0.0
      %740 = vmatprep.subr.mxu0 0.0
      %741 = vmatpush1.msra.mxu0 0.0
      %742 = vmatprep.subr.mxu0 0.0
      %743 = vmatpush1.msra.mxu0 0.0
      %744 = vmatprep.subr.mxu0 0.0
      %745 = vmatpush1.msra.mxu0 0.0
      %746 = vmatprep.subr.mxu0 0.0
      %747 = vmatpush1.msra.mxu0 0.0
      %748 = vmatprep.subr.mxu0 0.0
      %749 = vmatpush1.msra.mxu0 0.0
      %750 = vmatprep.subr.mxu0 0.0
      %751 = vmatpush1.msra.mxu0 0.0
      %752 = vmatprep.subr.mxu0 0.0
      %753 = vmatpush1.msra.mxu0 0.0
      %754 = vmatprep.subr.mxu0 0.0
      %755 = vmatpush1.msra.mxu0 0.0
      %756 = vmatprep.subr.mxu0 0.0
      %757 = vmatpush1.msra.mxu0 0.0
      %758 = vmatprep.subr.mxu0 0.0
      %759 = vmatpush1.msra.mxu0 0.0
      %760 = vmatprep.subr.mxu0 0.0
      %761 = vmatpush1.msra.mxu0 0.0
      %762 = vmatprep.subr.mxu0 0.0
      %763 = vmatpush1.msra.mxu0 0.0
      %764 = vmatprep.subr.mxu0 0.0
      %765 = vmatpush1.msra.mxu0 0.0
      %766 = vmatprep.subr.mxu0 0.0
      %767 = vmatpush1.msra.mxu0 0.0
      %768 = vmatprep.subr.mxu0 0.0
      %769 = vmatpush1.msra.mxu0 0.0
      %770 = vmatprep.subr.mxu0 0.0
      %771 = vmatpush1.msra.mxu0 0.0
      %772 = vmatprep.subr.mxu0 0.0
      %773 = vmatpush1.msra.mxu0 0.0
      %774 = vmatprep.subr.mxu0 0.0
      %775 = vmatpush1.msra.mxu0 0.0
      %776 = vmatprep.subr.mxu0 0.0
      %777 = vmatpush1.msra.mxu0 0.0
      %778 = vmatprep.subr.mxu0 0.0
      %779 = vmatpush1.msra.mxu0 0.0
      %780 = vmatprep.mubr.f32.mxu0 0.0
      %781 = vmatmul.mubr.f32.gmra.mrb[0].mxu0 %v714
      %v782 = vpop.f32.mrb[0].mxu0
      %v783 = vadd.f32 %v711, %v782
      %v784 = vpop.f32.mrb[0].mxu0
      %785 = vdwg.mxu0
      %vm786 = vcmask 7168
      %787 = vst.msk [vmem:[%s305] sm:$0xff] %vm786, %v783
      %p788 = scmp.lt.s32.totalorder %s21, 1
      %s789 = scalar_select %p788, %s21, 1
      %s790 = smul.addr %s789, 8
      %s791 = scalar_lea.vmem %s8, %s790
      // Predicated region
      $region53: #{graph_actor_critic_forward.3} parent=51 // pred_check
        %p792 = pneg %p212
      $region54: #{graph_actor_critic_forward.3} parent=51 // pred_check_branch
        %794 = sbr.rel (%p792) target = $region56
      $region55: #{graph_actor_critic_forward.3} parent=51 // pred_region
        _
      $region56: #{graph_actor_critic_forward.3} parent=51 // pred_fallthru
        _
    $region52: #{graph_actor_critic_forward.3} parent=5 // pred_fallthru
      _
    %p795 = scmp.le.s32.totalorder 2, %s16
    // Predicated region
    $region57: #{graph_actor_critic_forward.3} parent=5 // pred_check
      %p796 = pneg %p795
    $region58: #{graph_actor_critic_forward.3} parent=5 // pred_check_branch
      %798 = sbr.rel (%p796) target = $region60
    $region59: #{graph_actor_critic_forward.3} parent=5 // pred_region
      %s799 = ssub.s32 %s16, 2
      // Predicated region
      $region61: #{graph_actor_critic_forward.3} parent=59 // pred_check
        %p800 = pneg %p218
      $region62: #{graph_actor_critic_forward.3} parent=59 // pred_check_branch
        %802 = sbr.rel (%p800) target = $region64
      $region63: #{graph_actor_critic_forward.3} parent=59 // pred_region
        %p803 = scmp.lt.s32.totalorder %s22, 1
        %s804 = scalar_select %p803, %s22, 1
        %s805 = smul.addr %s804, 8
        %s806 = scalar_lea.vmem %s8, %s805
      $region64: #{graph_actor_critic_forward.3} parent=59 // pred_fallthru
        _
    $region60: #{graph_actor_critic_forward.3} parent=5 // pred_fallthru
      _
  $region6: #{graph_actor_critic_forward.3} parent=0 // loop_footer
    %s20 = sadd.s32 1, %s16
  $region7: #{graph_actor_critic_forward.3} parent=0 // loop_footer_branch
    %15 = sbr.rel target = $region3
  $region8: #{graph_actor_critic_forward.3} parent=0 // loop_exit
    _

// kernel: graph_actor_critic_forward.4
$region0: #{graph_actor_critic_forward.4}
  #allocation0 [shape = 'u32[]', space=smem, size = 0x4, offset = 0x4, fixed_abs, tag = 'smem constant byte address 0x4 - core index']
  #allocation1 [shape = 'u32[144,128]{1,0:T(1,128)}', space=vmem, size = 0x12000, scoped, tag = 'internal scratch']
  #allocation2 [shape = 'f32[96,32]{1,0:T(8,128)}', space=vmem, size = 0xc000, scoped, tag = 'scratch operand']
  #allocation3 [shape = 'f32[1,1]{1,0:T(1,128)S(1)}', space=vmem, size = 0x200, scoped, tag = 'scoped memory for graph_actor_critic_forward.4']
  %s0 = inlined_call_operand.vmem [shape: f32[2,8,32], index: 0, kind: input, shape index: {}]
  %s1 = inlined_call_operand.vmem [shape: f32[48,8], index: 1, kind: input, shape index: {}]
  %s2 = inlined_call_operand.vmem [shape: f32[48,32], index: 2, kind: input, shape index: {}]
  %s3 = inlined_call_operand.vmem [shape: f32[1,32], index: 3, kind: input, shape index: {}]
  %s4 = inlined_call_operand.vmem [shape: f32[32,32], index: 4, kind: input, shape index: {}]
  %s5 = inlined_call_operand.vmem [shape: f32[1,32], index: 5, kind: input, shape index: {}]
  %s6 = inlined_call_operand.vmem [shape: f32[32,1], index: 6, kind: input, shape index: {}]
  %s7 = inlined_call_operand.<no memory space> [shape: f32[1,1], index: 7, kind: input, shape index: {}]
  %s8 = inlined_call_operand.vmem [shape: f32[6,48], index: 8, kind: input, shape index: {}]
  %s9 = inlined_call_operand.vmem [shape: f32[12,1], index: 9, kind: output, shape index: {}]
  %s10 = sld [smem:[#allocation0]]
  $region46: #{graph_actor_critic_forward.4} parent=0
    _
  %s12 = ssub.s32 1, %s10
  %s13 = scalar_select 0, %s12, %s10
  %v14 = vstv %s7
  %15 = vst [vmem:[#allocation3] sm:$0x1] %v14
  // Predicated region
  $region2: #{graph_actor_critic_forward.4} parent=0 // pred_check
    _
  $region3: #{graph_actor_critic_forward.4} parent=0 // pred_check_branch
    %17 = sbr.rel (0) target = $region5
  $region4: #{graph_actor_critic_forward.4} parent=0 // pred_region
    _
  $region5: #{graph_actor_critic_forward.4} parent=0 // pred_fallthru
    _
  // Predicated region
  $region6: #{graph_actor_critic_forward.4} parent=0 // pred_check
    _
  $region7: #{graph_actor_critic_forward.4} parent=0 // pred_check_branch
    %19 = sbr.rel (0) target = $region9
  $region8: #{graph_actor_critic_forward.4} parent=0 // pred_region
    _
  $region9: #{graph_actor_critic_forward.4} parent=0 // pred_fallthru
    _
  // Predicated region
  $region10: #{graph_actor_critic_forward.4} parent=0 // pred_check
    _
  $region11: #{graph_actor_critic_forward.4} parent=0 // pred_check_branch
    %21 = sbr.rel (0) target = $region13
  $region12: #{graph_actor_critic_forward.4} parent=0 // pred_region
    _
  $region13: #{graph_actor_critic_forward.4} parent=0 // pred_fallthru
    _
  // Predicated region
  $region14: #{graph_actor_critic_forward.4} parent=0 // pred_check
    _
  $region15: #{graph_actor_critic_forward.4} parent=0 // pred_check_branch
    %23 = sbr.rel (0) target = $region17
  $region16: #{graph_actor_critic_forward.4} parent=0 // pred_region
    _
  $region17: #{graph_actor_critic_forward.4} parent=0 // pred_fallthru
    _
  // Predicated region
  $region18: #{graph_actor_critic_forward.4} parent=0 // pred_check
    _
  $region19: #{graph_actor_critic_forward.4} parent=0 // pred_check_branch
    %25 = sbr.rel (0) target = $region21
  $region20: #{graph_actor_critic_forward.4} parent=0 // pred_region
    _
  $region21: #{graph_actor_critic_forward.4} parent=0 // pred_fallthru
    _
  // Predicated region
  $region22: #{graph_actor_critic_forward.4} parent=0 // pred_check
    _
  $region23: #{graph_actor_critic_forward.4} parent=0 // pred_check_branch
    %27 = sbr.rel (0) target = $region25
  $region24: #{graph_actor_critic_forward.4} parent=0 // pred_region
    _
  $region25: #{graph_actor_critic_forward.4} parent=0 // pred_fallthru
    _
  // Predicated region
  $region26: #{graph_actor_critic_forward.4} parent=0 // pred_check
    _
  $region27: #{graph_actor_critic_forward.4} parent=0 // pred_check_branch
    %29 = sbr.rel (0) target = $region29
  $region28: #{graph_actor_critic_forward.4} parent=0 // pred_region
    _
  $region29: #{graph_actor_critic_forward.4} parent=0 // pred_fallthru
    _
  // Predicated region
  $region30: #{graph_actor_critic_forward.4} parent=0 // pred_check
    _
  $region31: #{graph_actor_critic_forward.4} parent=0 // pred_check_branch
    %31 = sbr.rel (0) target = $region33
  $region32: #{graph_actor_critic_forward.4} parent=0 // pred_region
    _
  $region33: #{graph_actor_critic_forward.4} parent=0 // pred_fallthru
    _
  // Predicated region
  $region34: #{graph_actor_critic_forward.4} parent=0 // pred_check
    _
  $region35: #{graph_actor_critic_forward.4} parent=0 // pred_check_branch
    %33 = sbr.rel (0) target = $region37
  $region36: #{graph_actor_critic_forward.4} parent=0 // pred_region
    _
  $region37: #{graph_actor_critic_forward.4} parent=0 // pred_fallthru
    _
  %v34 = vld [vmem:[%s1] sm:$0xff]
  %v35 = vld [vmem:[%s1 + $0x8] sm:$0xff]
  %v36 = vld [vmem:[%s1 + $0x10] sm:$0xff]
  %v37 = vld [vmem:[%s1 + $0x18] sm:$0xff]
  %v38 = vld [vmem:[%s1 + $0x20] sm:$0xff]
  %v39 = vld [vmem:[%s1 + $0x28] sm:$0xff]
  %v40 = vld [vmem:[%s2] sm:$0xff]
  %v41 = vld [vmem:[%s2 + $0x8] sm:$0xff]
  %v42 = vld [vmem:[%s2 + $0x10] sm:$0xff]
  %v43 = vld [vmem:[%s2 + $0x18] sm:$0xff]
  %v44 = vld [vmem:[%s2 + $0x20] sm:$0xff]
  %v45 = vld [vmem:[%s2 + $0x28] sm:$0xff]
  %v46 = vld [vmem:[%s3] sm:$0x1]
  %v47 = vld [vmem:[%s4] sm:$0xff]
  %v48 = vld [vmem:[%s4 + $0x8] sm:$0xff]
  %v49 = vld [vmem:[%s4 + $0x10] sm:$0xff]
  %v50 = vld [vmem:[%s4 + $0x18] sm:$0xff]
  %v51 = vld [vmem:[%s5] sm:$0x1]
  %v52 = vld [vmem:[%s6] sm:$0xff]
  %v53 = vld [vmem:[%s6 + $0x8] sm:$0xff]
  %v54 = vld [vmem:[%s6 + $0x10] sm:$0xff]
  %v55 = vld [vmem:[%s6 + $0x18] sm:$0xff]
  %v56 = vld [vmem:[#allocation3] sm:$0x1]
  %v57 = vld [vmem:[%s8] sm:$0x3f]
  %v58 = vld [vmem:[%s0] sm:$0xff]
  %vm59 = vcmask 64512
  %v61 = vsel %vm59, %v34, 0
  %v64 = vsel %vm59, %v35, 0
  %v67 = vsel %vm59, %v36, 0
  %v70 = vsel %vm59, %v37, 0
  %v73 = vsel %vm59, %v38, 0
  %v76 = vsel %vm59, %v39, 0
  %78 = vmatprep.subr.mxu0 0.0
  %79 = vmatpush1.msra.mxu0 %v58
  %80 = vmatprep.subr.mxu0 0.0
  %81 = vmatpush1.msra.mxu0 0.0
  %82 = vmatprep.subr.mxu0 0.0
  %83 = vmatpush1.msra.mxu0 0.0
  %84 = vmatprep.subr.mxu0 0.0
  %85 = vmatpush1.msra.mxu0 0.0
  %86 = vmatprep.subr.mxu0 0.0
  %87 = vmatpush1.msra.mxu0 0.0
  %88 = vmatprep.subr.mxu0 0.0
  %89 = vmatpush1.msra.mxu0 0.0
  %90 = vmatprep.subr.mxu0 0.0
  %91 = vmatpush1.msra.mxu0 0.0
  %92 = vmatprep.subr.mxu0 0.0
  %93 = vmatpush1.msra.mxu0 0.0
  %94 = vmatprep.subr.mxu0 0.0
  %95 = vmatpush1.msra.mxu0 0.0
  %96 = vmatprep.subr.mxu0 0.0
  %97 = vmatpush1.msra.mxu0 0.0
  %98 = vmatprep.subr.mxu0 0.0
  %99 = vmatpush1.msra.mxu0 0.0
  %100 = vmatprep.subr.mxu0 0.0
  %101 = vmatpush1.msra.mxu0 0.0
  %102 = vmatprep.subr.mxu0 0.0
  %103 = vmatpush1.msra.mxu0 0.0
  %104 = vmatprep.subr.mxu0 0.0
  %105 = vmatpush1.msra.mxu0 0.0
  %106 = vmatprep.subr.mxu0 0.0
  %107 = vmatpush1.msra.mxu0 0.0
  %108 = vmatprep.subr.mxu0 0.0
  %109 = vmatpush1.msra.mxu0 0.0
  %110 = vmatprep.subr.mxu0 0.0
  %111 = vmatpush1.msra.mxu0 0.0
  %112 = vmatprep.subr.mxu0 0.0
  %113 = vmatpush1.msra.mxu0 0.0
  %114 = vmatprep.subr.mxu0 0.0
  %115 = vmatpush1.msra.mxu0 0.0
  %116 = vmatprep.subr.mxu0 0.0
  %117 = vmatpush1.msra.mxu0 0.0
  %118 = vmatprep.subr.mxu0 0.0
  %119 = vmatpush1.msra.mxu0 0.0
  %120 = vmatprep.subr.mxu0 0.0
  %121 = vmatpush1.msra.mxu0 0.0
  %122 = vmatprep.subr.mxu0 0.0
  %123 = vmatpush1.msra.mxu0 0.0
  %124 = vmatprep.subr.mxu0 0.0
  %125 = vmatpush1.msra.mxu0 0.0
  %126 = vmatprep.subr.mxu0 0.0
  %127 = vmatpush1.msra.mxu0 0.0
  %128 = vmatprep.subr.mxu0 0.0
  %129 = vmatpush1.msra.mxu0 0.0
  %130 = vmatprep.subr.mxu0 0.0
  %131 = vmatpush1.msra.mxu0 0.0
  %132 = vmatprep.subr.mxu0 0.0
  %133 = vmatpush1.msra.mxu0 0.0
  %134 = vmatprep.subr.mxu0 0.0
  %135 = vmatpush1.msra.mxu0 0.0
  %136 = vmatprep.subr.mxu0 0.0
  %137 = vmatpush1.msra.mxu0 0.0
  %138 = vmatprep.subr.mxu0 0.0
  %139 = vmatpush1.msra.mxu0 0.0
  %140 = vmatprep.subr.mxu0 0.0
  %141 = vmatpush1.msra.mxu0 0.0
  %142 = vmatprep.mubr.f32.mxu0 0.0
  %143 = vmatmul.mubr.f32.gmra.mrb[0].mxu0 %v61
  %v144 = vpop.f32.mrb[0].mxu0
  %v145 = vadd.f32 %v40, %v144
  %v146 = vpop.f32.mrb[0].mxu0
  %147 = vmatprep.mubr.f32.mxu0 0.0
  %148 = vmatmul.mubr.f32.gmra.mrb[0].mxu0 %v64
  %v149 = vpop.f32.mrb[0].mxu0
  %v150 = vadd.f32 %v41, %v149
  %v151 = vpop.f32.mrb[0].mxu0
  %152 = vmatprep.mubr.f32.mxu0 0.0
  %153 = vmatmul.mubr.f32.gmra.mrb[0].mxu0 %v67
  %v154 = vpop.f32.mrb[0].mxu0
  %v155 = vadd.f32 %v42, %v154
  %v156 = vpop.f32.mrb[0].mxu0
  %157 = vmatprep.mubr.f32.mxu0 0.0
  %158 = vmatmul.mubr.f32.gmra.mrb[0].mxu0 %v70
  %v159 = vpop.f32.mrb[0].mxu0
  %v160 = vadd.f32 %v43, %v159
  %v161 = vpop.f32.mrb[0].mxu0
  %162 = vmatprep.mubr.f32.mxu0 0.0
  %163 = vmatmul.mubr.f32.gmra.mrb[0].mxu0 %v73
  %v164 = vpop.f32.mrb[0].mxu0
  %v165 = vadd.f32 %v44, %v164
  %v166 = vpop.f32.mrb[0].mxu0
  %167 = vmatprep.mubr.f32.mxu0 0.0
  %168 = vmatmul.mubr.f32.gmra.mrb[0].mxu0 %v76
  %v169 = vpop.f32.mrb[0].mxu0
  %v170 = vadd.f32 %v45, %v169
  %v171 = vpop.f32.mrb[0].mxu0
  %172 = vdwg.mxu0
  %v174 = vlaneseq
  %v175 = vshrl.u32 %v174, 7
  %v176 = vsub.s32 0, %v175
  %v177 = vrot.slane %v46, %v176
  %v179 = vadd.f32 %v145, %v177
  %v180 = vadd.f32 %v150, %v177
  %v181 = vadd.f32 %v155, %v177
  %v182 = vadd.f32 %v160, %v177
  %v183 = vadd.f32 %v165, %v177
  %v184 = vadd.f32 %v170, %v177
  %v185 = vmax.f32 %v179, 0.0
  %v186 = vmax.f32 %v180, 0.0
  %v187 = vmax.f32 %v181, 0.0
  %v188 = vmax.f32 %v182, 0.0
  %v189 = vmax.f32 %v183, 0.0
  %v190 = vmax.f32 %v184, 0.0
  %vm191 = vcmask 261120
  %192 = vst.msk [vmem:[#allocation2] sm:$0xff] %vm191, %v185
  %193 = vst.msk [vmem:[#allocation2 + $0x8] sm:$0xff] %vm191, %v186
  %194 = vst.msk [vmem:[#allocation2 + $0x10] sm:$0xff] %vm191, %v187
  %195 = vst.msk [vmem:[#allocation2 + $0x18] sm:$0xff] %vm191, %v188
  %196 = vst.msk [vmem:[#allocation2 + $0x20] sm:$0xff] %vm191, %v189
  %197 = vst.msk [vmem:[#allocation2 + $0x28] sm:$0xff] %vm191, %v190
  %s198 = scalar_lea.vmem %s0, 8
  %v199 = vld [vmem:[%s198] sm:$0xff]
  %200 = vmatprep.subr.mxu0 0.0
  %201 = vmatpush1.msra.mxu0 %v199
  %202 = vmatprep.subr.mxu0 0.0
  %203 = vmatpush1.msra.mxu0 0.0
  %204 = vmatprep.subr.mxu0 0.0
  %205 = vmatpush1.msra.mxu0 0.0
  %206 = vmatprep.subr.mxu0 0.0
  %207 = vmatpush1.msra.mxu0 0.0
  %208 = vmatprep.subr.mxu0 0.0
  %209 = vmatpush1.msra.mxu0 0.0
  %210 = vmatprep.subr.mxu0 0.0
  %211 = vmatpush1.msra.mxu0 0.0
  %212 = vmatprep.subr.mxu0 0.0
  %213 = vmatpush1.msra.mxu0 0.0
  %214 = vmatprep.subr.mxu0 0.0
  %215 = vmatpush1.msra.mxu0 0.0
  %216 = vmatprep.subr.mxu0 0.0
  %217 = vmatpush1.msra.mxu0 0.0
  %218 = vmatprep.subr.mxu0 0.0
  %219 = vmatpush1.msra.mxu0 0.0
  %220 = vmatprep.subr.mxu0 0.0
  %221 = vmatpush1.msra.mxu0 0.0
  %222 = vmatprep.subr.mxu0 0.0
  %223 = vmatpush1.msra.mxu0 0.0
  %224 = vmatprep.subr.mxu0 0.0
  %225 = vmatpush1.msra.mxu0 0.0
  %226 = vmatprep.subr.mxu0 0.0
  %227 = vmatpush1.msra.mxu0 0.0
  %228 = vmatprep.subr.mxu0 0.0
  %229 = vmatpush1.msra.mxu0 0.0
  %230 = vmatprep.subr.mxu0 0.0
  %231 = vmatpush1.msra.mxu0 0.0
  %232 = vmatprep.subr.mxu0 0.0
  %233 = vmatpush1.msra.mxu0 0.0
  %234 = vmatprep.subr.mxu0 0.0
  %235 = vmatpush1.msra.mxu0 0.0
  %236 = vmatprep.subr.mxu0 0.0
  %237 = vmatpush1.msra.mxu0 0.0
  %238 = vmatprep.subr.mxu0 0.0
  %239 = vmatpush1.msra.mxu0 0.0
  %240 = vmatprep.subr.mxu0 0.0
  %241 = vmatpush1.msra.mxu0 0.0
  %242 = vmatprep.subr.mxu0 0.0
  %243 = vmatpush1.msra.mxu0 0.0
  %244 = vmatprep.subr.mxu0 0.0
  %245 = vmatpush1.msra.mxu0 0.0
  %246 = vmatprep.subr.mxu0 0.0
  %247 = vmatpush1.msra.mxu0 0.0
  %248 = vmatprep.subr.mxu0 0.0
  %249 = vmatpush1.msra.mxu0 0.0
  %250 = vmatprep.subr.mxu0 0.0
  %251 = vmatpush1.msra.mxu0 0.0
  %252 = vmatprep.subr.mxu0 0.0
  %253 = vmatpush1.msra.mxu0 0.0
  %254 = vmatprep.subr.mxu0 0.0
  %255 = vmatpush1.msra.mxu0 0.0
  %256 = vmatprep.subr.mxu0 0.0
  %257 = vmatpush1.msra.mxu0 0.0
  %258 = vmatprep.subr.mxu0 0.0
  %259 = vmatpush1.msra.mxu0 0.0
  %260 = vmatprep.subr.mxu0 0.0
  %261 = vmatpush1.msra.mxu0 0.0
  %262 = vmatprep.subr.mxu0 0.0
  %263 = vmatpush1.msra.mxu0 0.0
  %264 = vmatprep.mubr.f32.mxu0 0.0
  %265 = vmatmul.mubr.f32.gmra.mrb[0].mxu0 %v61
  %v266 = vpop.f32.mrb[0].mxu0
  %v267 = vadd.f32 %v40, %v266
  %v268 = vpop.f32.mrb[0].mxu0
  %269 = vmatprep.mubr.f32.mxu0 0.0
  %270 = vmatmul.mubr.f32.gmra.mrb[0].mxu0 %v64
  %v271 = vpop.f32.mrb[0].mxu0
  %v272 = vadd.f32 %v41, %v271
  %v273 = vpop.f32.mrb[0].mxu0
  %274 = vmatprep.mubr.f32.mxu0 0.0
  %275 = vmatmul.mubr.f32.gmra.mrb[0].mxu0 %v67
  %v276 = vpop.f32.mrb[0].mxu0
  %v277 = vadd.f32 %v42, %v276
  %v278 = vpop.f32.mrb[0].mxu0
  %279 = vmatprep.mubr.f32.mxu0 0.0
  %280 = vmatmul.mubr.f32.gmra.mrb[0].mxu0 %v70
  %v281 = vpop.f32.mrb[0].mxu0
  %v282 = vadd.f32 %v43, %v281
  %v283 = vpop.f32.mrb[0].mxu0
  %284 = vmatprep.mubr.f32.mxu0 0.0
  %285 = vmatmul.mubr.f32.gmra.mrb[0].mxu0 %v73
  %v286 = vpop.f32.mrb[0].mxu0
  %v287 = vadd.f32 %v44, %v286
  %v288 = vpop.f32.mrb[0].mxu0
  %289 = vmatprep.mubr.f32.mxu0 0.0
  %290 = vmatmul.mubr.f32.gmra.mrb[0].mxu0 %v76
  %v291 = vpop.f32.mrb[0].mxu0
  %v292 = vadd.f32 %v45, %v291
  %v293 = vpop.f32.mrb[0].mxu0
  %294 = vdwg.mxu0
  %v295 = vadd.f32 %v267, %v177
  %v296 = vadd.f32 %v272, %v177
  %v297 = vadd.f32 %v277, %v177
  %v298 = vadd.f32 %v282, %v177
  %v299 = vadd.f32 %v287, %v177
  %v300 = vadd.f32 %v292, %v177
  %v301 = vmax.f32 %v295, 0.0
  %v302 = vmax.f32 %v296, 0.0
  %v303 = vmax.f32 %v297, 0.0
  %v304 = vmax.f32 %v298, 0.0
  %v305 = vmax.f32 %v299, 0.0
  %v306 = vmax.f32 %v300, 0.0
  %307 = vst.msk [vmem:[#allocation2 + $0x30] sm:$0xff] %vm191, %v301
  %308 = vst.msk [vmem:[#allocation2 + $0x38] sm:$0xff] %vm191, %v302
  %309 = vst.msk [vmem:[#allocation2 + $0x40] sm:$0xff] %vm191, %v303
  %310 = vst.msk [vmem:[#allocation2 + $0x48] sm:$0xff] %vm191, %v304
  %311 = vst.msk [vmem:[#allocation2 + $0x50] sm:$0xff] %vm191, %v305
  %312 = vst.msk [vmem:[#allocation2 + $0x58] sm:$0xff] %vm191, %v306
  %v313 = vld [vmem:[#allocation2] sm:$0xff]
  %v314 = vld [vmem:[#allocation2 + $0x8] sm:$0xff]
  %v315 = vld [vmem:[#allocation2 + $0x10] sm:$0xff]
  %v316 = vld [vmem:[#allocation2 + $0x18] sm:$0xff]
  %v317 = vld [vmem:[#allocation2 + $0x20] sm:$0xff]
  %v318 = vld [vmem:[#allocation2 + $0x28] sm:$0xff]
  %v319 = vld [vmem:[#allocation2 + $0x30] sm:$0xff]
  %v320 = vld [vmem:[#allocation2 + $0x38] sm:$0xff]
  %v321 = vld [vmem:[#allocation2 + $0x40] sm:$0xff]
  %v322 = vld [vmem:[#allocation2 + $0x48] sm:$0xff]
  %v323 = vld [vmem:[#allocation2 + $0x50] sm:$0xff]
  %v324 = vld [vmem:[#allocation2 + $0x58] sm:$0xff]
  %v326 = vlaneseq
  %v327 = vshrl.u32 %v326, 7
  %v328 = vsub.s32 0, %v327
  %v329 = vrot.slane %v51, %v328
  %v332 = vsel %vm191, %v313, 0
  %v335 = vsel %vm191, %v314, 0
  %v338 = vsel %vm191, %v315, 0
  %v341 = vsel %vm191, %v316, 0
  %v344 = vsel %vm191, %v317, 0
  %v347 = vsel %vm191, %v318, 0
  %v350 = vsel %vm191, %v319, 0
  %v353 = vsel %vm191, %v320, 0
  %v356 = vsel %vm191, %v321, 0
  %v359 = vsel %vm191, %v322, 0
  %v362 = vsel %vm191, %v323, 0
  %v365 = vsel %vm191, %v324, 0
  %367 = vmatprep.subr.mxu0 0.0
  %368 = vmatpush1.msra.mxu0 %v47
  %369 = vmatprep.subr.mxu0 0.0
  %370 = vmatpush1.msra.mxu0 %v48
  %371 = vmatprep.subr.mxu0 0.0
  %372 = vmatpush1.msra.mxu0 %v49
  %373 = vmatprep.subr.mxu0 0.0
  %374 = vmatpush1.msra.mxu0 %v50
  %375 = vmatprep.subr.mxu0 0.0
  %376 = vmatpush1.msra.mxu0 0.0
  %377 = vmatprep.subr.mxu0 0.0
  %378 = vmatpush1.msra.mxu0 0.0
  %379 = vmatprep.subr.mxu0 0.0
  %380 = vmatpush1.msra.mxu0 0.0
  %381 = vmatprep.subr.mxu0 0.0
  %382 = vmatpush1.msra.mxu0 0.0
  %383 = vmatprep.subr.mxu0 0.0
  %384 = vmatpush1.msra.mxu0 0.0
  %385 = vmatprep.subr.mxu0 0.0
  %386 = vmatpush1.msra.mxu0 0.0
  %387 = vmatprep.subr.mxu0 0.0
  %388 = vmatpush1.msra.mxu0 0.0
  %389 = vmatprep.subr.mxu0 0.0
  %390 = vmatpush1.msra.mxu0 0.0
  %391 = vmatprep.subr.mxu0 0.0
  %392 = vmatpush1.msra.mxu0 0.0
  %393 = vmatprep.subr.mxu0 0.0
  %394 = vmatpush1.msra.mxu0 0.0
  %395 = vmatprep.subr.mxu0 0.0
  %396 = vmatpush1.msra.mxu0 0.0
  %397 = vmatprep.subr.mxu0 0.0
  %398 = vmatpush1.msra.mxu0 0.0
  %399 = vmatprep.subr.mxu0 0.0
  %400 = vmatpush1.msra.mxu0 0.0
  %401 = vmatprep.subr.mxu0 0.0
  %402 = vmatpush1.msra.mxu0 0.0
  %403 = vmatprep.subr.mxu0 0.0
  %404 = vmatpush1.msra.mxu0 0.0
  %405 = vmatprep.subr.mxu0 0.0
  %406 = vmatpush1.msra.mxu0 0.0
  %407 = vmatprep.subr.mxu0 0.0
  %408 = vmatpush1.msra.mxu0 0.0
  %409 = vmatprep.subr.mxu0 0.0
  %410 = vmatpush1.msra.mxu0 0.0
  %411 = vmatprep.subr.mxu0 0.0
  %412 = vmatpush1.msra.mxu0 0.0
  %413 = vmatprep.subr.mxu0 0.0
  %414 = vmatpush1.msra.mxu0 0.0
  %415 = vmatprep.subr.mxu0 0.0
  %416 = vmatpush1.msra.mxu0 0.0
  %417 = vmatprep.subr.mxu0 0.0
  %418 = vmatpush1.msra.mxu0 0.0
  %419 = vmatprep.subr.mxu0 0.0
  %420 = vmatpush1.msra.mxu0 0.0
  %421 = vmatprep.subr.mxu0 0.0
  %422 = vmatpush1.msra.mxu0 0.0
  %423 = vmatprep.subr.mxu0 0.0
  %424 = vmatpush1.msra.mxu0 0.0
  %425 = vmatprep.subr.mxu0 0.0
  %426 = vmatpush1.msra.mxu0 0.0
  %427 = vmatprep.subr.mxu0 0.0
  %428 = vmatpush1.msra.mxu0 0.0
  %429 = vmatprep.subr.mxu0 0.0
  %430 = vmatpush1.msra.mxu0 0.0
  %431 = vmatprep.mubr.f32.mxu0 0.0
  %432 = vmatmul.mubr.f32.gmra.mrb[0].mxu0 %v332
  %v433 = vpop.f32.mrb[0].mxu0
  %v434 = vadd.f32 %v329, %v433
  %v435 = vpop.f32.mrb[0].mxu0
  %436 = vmatprep.mubr.f32.mxu0 0.0
  %437 = vmatmul.mubr.f32.gmra.mrb[0].mxu0 %v335
  %v438 = vpop.f32.mrb[0].mxu0
  %v439 = vadd.f32 %v329, %v438
  %v440 = vpop.f32.mrb[0].mxu0
  %441 = vmatprep.mubr.f32.mxu0 0.0
  %442 = vmatmul.mubr.f32.gmra.mrb[0].mxu0 %v338
  %v443 = vpop.f32.mrb[0].mxu0
  %v444 = vadd.f32 %v329, %v443
  %v445 = vpop.f32.mrb[0].mxu0
  %446 = vmatprep.mubr.f32.mxu0 0.0
  %447 = vmatmul.mubr.f32.gmra.mrb[0].mxu0 %v341
  %v448 = vpop.f32.mrb[0].mxu0
  %v449 = vadd.f32 %v329, %v448
  %v450 = vpop.f32.mrb[0].mxu0
  %451 = vmatprep.mubr.f32.mxu0 0.0
  %452 = vmatmul.mubr.f32.gmra.mrb[0].mxu0 %v344
  %v453 = vpop.f32.mrb[0].mxu0
  %v454 = vadd.f32 %v329, %v453
  %v455 = vpop.f32.mrb[0].mxu0
  %456 = vmatprep.mubr.f32.mxu0 0.0
  %457 = vmatmul.mubr.f32.gmra.mrb[0].mxu0 %v347
  %v458 = vpop.f32.mrb[0].mxu0
  %v459 = vadd.f32 %v329, %v458
  %v460 = vpop.f32.mrb[0].mxu0
  %461 = vmatprep.mubr.f32.mxu0 0.0
  %462 = vmatmul.mubr.f32.gmra.mrb[0].mxu0 %v350
  %v463 = vpop.f32.mrb[0].mxu0
  %v464 = vadd.f32 %v329, %v463
  %v465 = vpop.f32.mrb[0].mxu0
  %466 = vmatprep.mubr.f32.mxu0 0.0
  %467 = vmatmul.mubr.f32.gmra.mrb[0].mxu0 %v353
  %v468 = vpop.f32.mrb[0].mxu0
  %v469 = vadd.f32 %v329, %v468
  %v470 = vpop.f32.mrb[0].mxu0
  %471 = vmatprep.mubr.f32.mxu0 0.0
  %472 = vmatmul.mubr.f32.gmra.mrb[0].mxu0 %v356
  %v473 = vpop.f32.mrb[0].mxu0
  %v474 = vadd.f32 %v329, %v473
  %v475 = vpop.f32.mrb[0].mxu0
  %476 = vmatprep.mubr.f32.mxu0 0.0
  %477 = vmatmul.mubr.f32.gmra.mrb[0].mxu0 %v359
  %v478 = vpop.f32.mrb[0].mxu0
  %v479 = vadd.f32 %v329, %v478
  %v480 = vpop.f32.mrb[0].mxu0
  %481 = vmatprep.mubr.f32.mxu0 0.0
  %482 = vmatmul.mubr.f32.gmra.mrb[0].mxu0 %v362
  %v483 = vpop.f32.mrb[0].mxu0
  %v484 = vadd.f32 %v329, %v483
  %v485 = vpop.f32.mrb[0].mxu0
  %486 = vmatprep.mubr.f32.mxu0 0.0
  %487 = vmatmul.mubr.f32.gmra.mrb[0].mxu0 %v365
  %v488 = vpop.f32.mrb[0].mxu0
  %v489 = vadd.f32 %v329, %v488
  %v490 = vpop.f32.mrb[0].mxu0
  %491 = vdwg.mxu0
  %v492 = vmax.f32 %v434, 0.0
  %v493 = vmax.f32 %v439, 0.0
  %v494 = vmax.f32 %v444, 0.0
  %v495 = vmax.f32 %v449, 0.0
  %v496 = vmax.f32 %v454, 0.0
  %v497 = vmax.f32 %v459, 0.0
  %v498 = vmax.f32 %v464, 0.0
  %v499 = vmax.f32 %v469, 0.0
  %v500 = vmax.f32 %v474, 0.0
  %v501 = vmax.f32 %v479, 0.0
  %v502 = vmax.f32 %v484, 0.0
  %v503 = vmax.f32 %v489, 0.0
  %vm504 = vcmask 392192
  %v506 = vsel %vm504, %v57, 0
  %508 = vmatprep.subr.mxu0 0.0
  %509 = vmatpush1.msra.mxu0 %v492
  %510 = vmatprep.subr.mxu0 0.0
  %511 = vmatpush1.msra.mxu0 %v493
  %512 = vmatprep.subr.mxu0 0.0
  %513 = vmatpush1.msra.mxu0 %v494
  %514 = vmatprep.subr.mxu0 0.0
  %515 = vmatpush1.msra.mxu0 %v495
  %516 = vmatprep.subr.mxu0 0.0
  %517 = vmatpush1.msra.mxu0 %v496
  %518 = vmatprep.subr.mxu0 0.0
  %519 = vmatpush1.msra.mxu0 %v497
  %520 = vmatprep.subr.mxu0 0.0
  %521 = vmatpush1.msra.mxu0 0.0
  %522 = vmatprep.subr.mxu0 0.0
  %523 = vmatpush1.msra.mxu0 0.0
  %524 = vmatprep.subr.mxu0 0.0
  %525 = vmatpush1.msra.mxu0 0.0
  %526 = vmatprep.subr.mxu0 0.0
  %527 = vmatpush1.msra.mxu0 0.0
  %528 = vmatprep.subr.mxu0 0.0
  %529 = vmatpush1.msra.mxu0 0.0
  %530 = vmatprep.subr.mxu0 0.0
  %531 = vmatpush1.msra.mxu0 0.0
  %532 = vmatprep.subr.mxu0 0.0
  %533 = vmatpush1.msra.mxu0 0.0
  %534 = vmatprep.subr.mxu0 0.0
  %535 = vmatpush1.msra.mxu0 0.0
  %536 = vmatprep.subr.mxu0 0.0
  %537 = vmatpush1.msra.mxu0 0.0
  %538 = vmatprep.subr.mxu0 0.0
  %539 = vmatpush1.msra.mxu0 0.0
  %540 = vmatprep.subr.mxu0 0.0
  %541 = vmatpush1.msra.mxu0 0.0
  %542 = vmatprep.subr.mxu0 0.0
  %543 = vmatpush1.msra.mxu0 0.0
  %544 = vmatprep.subr.mxu0 0.0
  %545 = vmatpush1.msra.mxu0 0.0
  %546 = vmatprep.subr.mxu0 0.0
  %547 = vmatpush1.msra.mxu0 0.0
  %548 = vmatprep.subr.mxu0 0.0
  %549 = vmatpush1.msra.mxu0 0.0
  %550 = vmatprep.subr.mxu0 0.0
  %551 = vmatpush1.msra.mxu0 0.0
  %552 = vmatprep.subr.mxu0 0.0
  %553 = vmatpush1.msra.mxu0 0.0
  %554 = vmatprep.subr.mxu0 0.0
  %555 = vmatpush1.msra.mxu0 0.0
  %556 = vmatprep.subr.mxu0 0.0
  %557 = vmatpush1.msra.mxu0 0.0
  %558 = vmatprep.subr.mxu0 0.0
  %559 = vmatpush1.msra.mxu0 0.0
  %560 = vmatprep.subr.mxu0 0.0
  %561 = vmatpush1.msra.mxu0 0.0
  %562 = vmatprep.subr.mxu0 0.0
  %563 = vmatpush1.msra.mxu0 0.0
  %564 = vmatprep.subr.mxu0 0.0
  %565 = vmatpush1.msra.mxu0 0.0
  %566 = vmatprep.subr.mxu0 0.0
  %567 = vmatpush1.msra.mxu0 0.0
  %568 = vmatprep.subr.mxu0 0.0
  %569 = vmatpush1.msra.mxu0 0.0
  %570 = vmatprep.subr.mxu0 0.0
  %571 = vmatpush1.msra.mxu0 0.0
  %572 = vmatprep.mubr.f32.mxu0 0.0
  %573 = vmatmul.mubr.f32.gmra.mrb[0].mxu0 %v506
  %v574 = vpop.f32.mrb[0].mxu0
  %v575 = vadd.f32 0.0, %v574
  %v576 = vpop.f32.mrb[0].mxu0
  %577 = vdwg.mxu0
  %v578 = vmul.f32 %v56, 8.0
  %v580 = vlaneseq
  %v581 = vshrl.u32 %v580, 7
  %v582 = vsub.s32 0, %v581
  %v583 = vrot.slane %v578, %v582
  %v586 = vsel %vm191, %v575, 0
  %588 = vmatprep.subr.mxu0 0.0
  %589 = vmatpush1.msra.mxu0 %v52
  %590 = vmatprep.subr.mxu0 0.0
  %591 = vmatpush1.msra.mxu0 %v53
  %592 = vmatprep.subr.mxu0 0.0
  %593 = vmatpush1.msra.mxu0 %v54
  %594 = vmatprep.subr.mxu0 0.0
  %595 = vmatpush1.msra.mxu0 %v55
  %596 = vmatprep.subr.mxu0 0.0
  %597 = vmatpush1.msra.mxu0 0.0
  %598 = vmatprep.subr.mxu0 0.0
  %599 = vmatpush1.msra.mxu0 0.0
  %600 = vmatprep.subr.mxu0 0.0
  %601 = vmatpush1.msra.mxu0 0.0
  %602 = vmatprep.subr.mxu0 0.0
  %603 = vmatpush1.msra.mxu0 0.0
  %604 = vmatprep.subr.mxu0 0.0
  %605 = vmatpush1.msra.mxu0 0.0
  %606 = vmatprep.subr.mxu0 0.0
  %607 = vmatpush1.msra.mxu0 0.0
  %608 = vmatprep.subr.mxu0 0.0
  %609 = vmatpush1.msra.mxu0 0.0
  %610 = vmatprep.subr.mxu0 0.0
  %611 = vmatpush1.msra.mxu0 0.0
  %612 = vmatprep.subr.mxu0 0.0
  %613 = vmatpush1.msra.mxu0 0.0
  %614 = vmatprep.subr.mxu0 0.0
  %615 = vmatpush1.msra.mxu0 0.0
  %616 = vmatprep.subr.mxu0 0.0
  %617 = vmatpush1.msra.mxu0 0.0
  %618 = vmatprep.subr.mxu0 0.0
  %619 = vmatpush1.msra.mxu0 0.0
  %620 = vmatprep.subr.mxu0 0.0
  %621 = vmatpush1.msra.mxu0 0.0
  %622 = vmatprep.subr.mxu0 0.0
  %623 = vmatpush1.msra.mxu0 0.0
  %624 = vmatprep.subr.mxu0 0.0
  %625 = vmatpush1.msra.mxu0 0.0
  %626 = vmatprep.subr.mxu0 0.0
  %627 = vmatpush1.msra.mxu0 0.0
  %628 = vmatprep.subr.mxu0 0.0
  %629 = vmatpush1.msra.mxu0 0.0
  %630 = vmatprep.subr.mxu0 0.0
  %631 = vmatpush1.msra.mxu0 0.0
  %632 = vmatprep.subr.mxu0 0.0
  %633 = vmatpush1.msra.mxu0 0.0
  %634 = vmatprep.subr.mxu0 0.0
  %635 = vmatpush1.msra.mxu0 0.0
  %636 = vmatprep.subr.mxu0 0.0
  %637 = vmatpush1.msra.mxu0 0.0
  %638 = vmatprep.subr.mxu0 0.0
  %639 = vmatpush1.msra.mxu0 0.0
  %640 = vmatprep.subr.mxu0 0.0
  %641 = vmatpush1.msra.mxu0 0.0
  %642 = vmatprep.subr.mxu0 0.0
  %643 = vmatpush1.msra.mxu0 0.0
  %644 = vmatprep.subr.mxu0 0.0
  %645 = vmatpush1.msra.mxu0 0.0
  %646 = vmatprep.subr.mxu0 0.0
  %647 = vmatpush1.msra.mxu0 0.0
  %648 = vmatprep.subr.mxu0 0.0
  %649 = vmatpush1.msra.mxu0 0.0
  %650 = vmatprep.subr.mxu0 0.0
  %651 = vmatpush1.msra.mxu0 0.0
  %652 = vmatprep.mubr.f32.mxu0 0.0
  %653 = vmatmul.mubr.f32.gmra.mrb[0].mxu0 %v586
  %v654 = vpop.f32.mrb[0].mxu0
  %v655 = vadd.f32 %v583, %v654
  %v656 = vpop.f32.mrb[0].mxu0
  %657 = vdwg.mxu0
  %vm658 = vcmask 5120
  %659 = vst.msk [vmem:[%s9] sm:$0x3f] %vm658, %v655
  %660 = vmatprep.subr.mxu0 0.0
  %661 = vmatpush1.msra.mxu0 %v498
  %662 = vmatprep.subr.mxu0 0.0
  %663 = vmatpush1.msra.mxu0 %v499
  %664 = vmatprep.subr.mxu0 0.0
  %665 = vmatpush1.msra.mxu0 %v500
  %666 = vmatprep.subr.mxu0 0.0
  %667 = vmatpush1.msra.mxu0 %v501
  %668 = vmatprep.subr.mxu0 0.0
  %669 = vmatpush1.msra.mxu0 %v502
  %670 = vmatprep.subr.mxu0 0.0
  %671 = vmatpush1.msra.mxu0 %v503
  %672 = vmatprep.subr.mxu0 0.0
  %673 = vmatpush1.msra.mxu0 0.0
  %674 = vmatprep.subr.mxu0 0.0
  %675 = vmatpush1.msra.mxu0 0.0
  %676 = vmatprep.subr.mxu0 0.0
  %677 = vmatpush1.msra.mxu0 0.0
  %678 = vmatprep.subr.mxu0 0.0
  %679 = vmatpush1.msra.mxu0 0.0
  %680 = vmatprep.subr.mxu0 0.0
  %681 = vmatpush1.msra.mxu0 0.0
  %682 = vmatprep.subr.mxu0 0.0
  %683 = vmatpush1.msra.mxu0 0.0
  %684 = vmatprep.subr.mxu0 0.0
  %685 = vmatpush1.msra.mxu0 0.0
  %686 = vmatprep.subr.mxu0 0.0
  %687 = vmatpush1.msra.mxu0 0.0
  %688 = vmatprep.subr.mxu0 0.0
  %689 = vmatpush1.msra.mxu0 0.0
  %690 = vmatprep.subr.mxu0 0.0
  %691 = vmatpush1.msra.mxu0 0.0
  %692 = vmatprep.subr.mxu0 0.0
  %693 = vmatpush1.msra.mxu0 0.0
  %694 = vmatprep.subr.mxu0 0.0
  %695 = vmatpush1.msra.mxu0 0.0
  %696 = vmatprep.subr.mxu0 0.0
  %697 = vmatpush1.msra.mxu0 0.0
  %698 = vmatprep.subr.mxu0 0.0
  %699 = vmatpush1.msra.mxu0 0.0
  %700 = vmatprep.subr.mxu0 0.0
  %701 = vmatpush1.msra.mxu0 0.0
  %702 = vmatprep.subr.mxu0 0.0
  %703 = vmatpush1.msra.mxu0 0.0
  %704 = vmatprep.subr.mxu0 0.0
  %705 = vmatpush1.msra.mxu0 0.0
  %706 = vmatprep.subr.mxu0 0.0
  %707 = vmatpush1.msra.mxu0 0.0
  %708 = vmatprep.subr.mxu0 0.0
  %709 = vmatpush1.msra.mxu0 0.0
  %710 = vmatprep.subr.mxu0 0.0
  %711 = vmatpush1.msra.mxu0 0.0
  %712 = vmatprep.subr.mxu0 0.0
  %713 = vmatpush1.msra.mxu0 0.0
  %714 = vmatprep.subr.mxu0 0.0
  %715 = vmatpush1.msra.mxu0 0.0
  %716 = vmatprep.subr.mxu0 0.0
  %717 = vmatpush1.msra.mxu0 0.0
  %718 = vmatprep.subr.mxu0 0.0
  %719 = vmatpush1.msra.mxu0 0.0
  %720 = vmatprep.subr.mxu0 0.0
  %721 = vmatpush1.msra.mxu0 0.0
  %722 = vmatprep.subr.mxu0 0.0
  %723 = vmatpush1.msra.mxu0 0.0
  %724 = vmatprep.mubr.f32.mxu0 0.0
  %725 = vmatmul.mubr.f32.gmra.mrb[0].mxu0 %v506
  %v726 = vpop.f32.mrb[0].mxu0
  %v727 = vadd.f32 0.0, %v726
  %v728 = vpop.f32.mrb[0].mxu0
  %729 = vdwg.mxu0
  %v731 = vsel %vm191, %v727, 0
  %733 = vmatprep.subr.mxu0 0.0
  %734 = vmatpush1.msra.mxu0 %v52
  %735 = vmatprep.subr.mxu0 0.0
  %736 = vmatpush1.msra.mxu0 %v53
  %737 = vmatprep.subr.mxu0 0.0
  %738 = vmatpush1.msra.mxu0 %v54
  %739 = vmatprep.subr.mxu0 0.0
  %740 = vmatpush1.msra.mxu0 %v55
  %741 = vmatprep.subr.mxu0 0.0
  %742 = vmatpush1.msra.mxu0 0.0
  %743 = vmatprep.subr.mxu0 0.0
  %744 = vmatpush1.msra.mxu0 0.0
  %745 = vmatprep.subr.mxu0 0.0
  %746 = vmatpush1.msra.mxu0 0.0
  %747 = vmatprep.subr.mxu0 0.0
  %748 = vmatpush1.msra.mxu0 0.0
  %749 = vmatprep.subr.mxu0 0.0
  %750 = vmatpush1.msra.mxu0 0.0
  %751 = vmatprep.subr.mxu0 0.0
  %752 = vmatpush1.msra.mxu0 0.0
  %753 = vmatprep.subr.mxu0 0.0
  %754 = vmatpush1.msra.mxu0 0.0
  %755 = vmatprep.subr.mxu0 0.0
  %756 = vmatpush1.msra.mxu0 0.0
  %757 = vmatprep.subr.mxu0 0.0
  %758 = vmatpush1.msra.mxu0 0.0
  %759 = vmatprep.subr.mxu0 0.0
  %760 = vmatpush1.msra.mxu0 0.0
  %761 = vmatprep.subr.mxu0 0.0
  %762 = vmatpush1.msra.mxu0 0.0
  %763 = vmatprep.subr.mxu0 0.0
  %764 = vmatpush1.msra.mxu0 0.0
  %765 = vmatprep.subr.mxu0 0.0
  %766 = vmatpush1.msra.mxu0 0.0
  %767 = vmatprep.subr.mxu0 0.0
  %768 = vmatpush1.msra.mxu0 0.0
  %769 = vmatprep.subr.mxu0 0.0
  %770 = vmatpush1.msra.mxu0 0.0
  %771 = vmatprep.subr.mxu0 0.0
  %772 = vmatpush1.msra.mxu0 0.0
  %773 = vmatprep.subr.mxu0 0.0
  %774 = vmatpush1.msra.mxu0 0.0
  %775 = vmatprep.subr.mxu0 0.0
  %776 = vmatpush1.msra.mxu0 0.0
  %777 = vmatprep.subr.mxu0 0.0
  %778 = vmatpush1.msra.mxu0 0.0
  %779 = vmatprep.subr.mxu0 0.0
  %780 = vmatpush1.msra.mxu0 0.0
  %781 = vmatprep.subr.mxu0 0.0
  %782 = vmatpush1.msra.mxu0 0.0
  %783 = vmatprep.subr.mxu0 0.0
  %784 = vmatpush1.msra.mxu0 0.0
  %785 = vmatprep.subr.mxu0 0.0
  %786 = vmatpush1.msra.mxu0 0.0
  %787 = vmatprep.subr.mxu0 0.0
  %788 = vmatpush1.msra.mxu0 0.0
  %789 = vmatprep.subr.mxu0 0.0
  %790 = vmatpush1.msra.mxu0 0.0
  %791 = vmatprep.subr.mxu0 0.0
  %792 = vmatpush1.msra.mxu0 0.0
  %793 = vmatprep.subr.mxu0 0.0
  %794 = vmatpush1.msra.mxu0 0.0
  %795 = vmatprep.subr.mxu0 0.0
  %796 = vmatpush1.msra.mxu0 0.0
  %797 = vmatprep.mubr.f32.mxu0 0.0
  %798 = vmatmul.mubr.f32.gmra.mrb[0].mxu0 %v731
  %v799 = vpop.f32.mrb[0].mxu0
  %v800 = vadd.f32 %v583, %v799
  %v801 = vpop.f32.mrb[0].mxu0
  %802 = vdwg.mxu0
  %803 = vst.msk [vmem:[%s9 + $0x6] sm:$0x3f] %vm658, %v800
  // Predicated region
  $region38: #{graph_actor_critic_forward.4} parent=0 // pred_check
    _
  $region39: #{graph_actor_critic_forward.4} parent=0 // pred_check_branch
    %805 = sbr.rel (0) target = $region41
  $region40: #{graph_actor_critic_forward.4} parent=0 // pred_region
    _
  $region41: #{graph_actor_critic_forward.4} parent=0 // pred_fallthru
    _
  // Predicated region
  $region42: #{graph_actor_critic_forward.4} parent=0 // pred_check
    _
  $region43: #{graph_actor_critic_forward.4} parent=0 // pred_check_branch
    %807 = sbr.rel (0) target = $region45
  $region44: #{graph_actor_critic_forward.4} parent=0 // pred_region
    _
  $region45: #{graph_actor_critic_forward.4} parent=0 // pred_fallthru
    _

// kernel: graph_actor_critic_forward.5
$region0: #{graph_actor_critic_forward.5}
  #allocation0 [shape = 'u32[]', space=smem, size = 0x4, offset = 0x4, fixed_abs, tag = 'smem constant byte address 0x4 - core index']
  #allocation1 [shape = 'u32[144,128]{1,0:T(1,128)}', space=vmem, size = 0x12000, scoped, tag = 'internal scratch']
  #allocation2 [shape = 'f32[16,32]{1,0:T(8,128)}', space=vmem, size = 0x2000, scoped, tag = 'scratch operand']
  #allocation3 [shape = 'f32[1,1]{1,0:T(1,128)S(1)}', space=vmem, size = 0x200, scoped, tag = 'scoped memory for graph_actor_critic_forward.5']
  %s0 = inlined_call_operand.vmem [shape: f32[2,8,32], index: 0, kind: input, shape index: {}]
  %s1 = inlined_call_operand.vmem [shape: f32[1,32], index: 1, kind: input, shape index: {}]
  %s2 = inlined_call_operand.vmem [shape: f32[32,32], index: 2, kind: input, shape index: {}]
  %s3 = inlined_call_operand.vmem [shape: f32[1,32], index: 3, kind: input, shape index: {}]
  %s4 = inlined_call_operand.vmem [shape: f32[32,1], index: 4, kind: input, shape index: {}]
  %s5 = inlined_call_operand.<no memory space> [shape: f32[1,1], index: 5, kind: input, shape index: {}]
  %s6 = inlined_call_operand.vmem [shape: f32[1,8], index: 6, kind: input, shape index: {}]
  %s7 = inlined_call_operand.vmem [shape: f32[2,1], index: 7, kind: output, shape index: {}]
  %s8 = sld [smem:[#allocation0]]
  $region38: #{graph_actor_critic_forward.5} parent=0
    _
  %s10 = ssub.s32 1, %s8
  %s11 = scalar_select 0, %s10, %s8
  %v12 = vstv %s5
  %13 = vst [vmem:[#allocation3] sm:$0x1] %v12
  // Predicated region
  $region2: #{graph_actor_critic_forward.5} parent=0 // pred_check
    _
  $region3: #{graph_actor_critic_forward.5} parent=0 // pred_check_branch
    %15 = sbr.rel (0) target = $region5
  $region4: #{graph_actor_critic_forward.5} parent=0 // pred_region
    _
  $region5: #{graph_actor_critic_forward.5} parent=0 // pred_fallthru
    _
  // Predicated region
  $region6: #{graph_actor_critic_forward.5} parent=0 // pred_check
    _
  $region7: #{graph_actor_critic_forward.5} parent=0 // pred_check_branch
    %17 = sbr.rel (0) target = $region9
  $region8: #{graph_actor_critic_forward.5} parent=0 // pred_region
    _
  $region9: #{graph_actor_critic_forward.5} parent=0 // pred_fallthru
    _
  // Predicated region
  $region10: #{graph_actor_critic_forward.5} parent=0 // pred_check
    _
  $region11: #{graph_actor_critic_forward.5} parent=0 // pred_check_branch
    %19 = sbr.rel (0) target = $region13
  $region12: #{graph_actor_critic_forward.5} parent=0 // pred_region
    _
  $region13: #{graph_actor_critic_forward.5} parent=0 // pred_fallthru
    _
  // Predicated region
  $region14: #{graph_actor_critic_forward.5} parent=0 // pred_check
    _
  $region15: #{graph_actor_critic_forward.5} parent=0 // pred_check_branch
    %21 = sbr.rel (0) target = $region17
  $region16: #{graph_actor_critic_forward.5} parent=0 // pred_region
    _
  $region17: #{graph_actor_critic_forward.5} parent=0 // pred_fallthru
    _
  // Predicated region
  $region18: #{graph_actor_critic_forward.5} parent=0 // pred_check
    _
  $region19: #{graph_actor_critic_forward.5} parent=0 // pred_check_branch
    %23 = sbr.rel (0) target = $region21
  $region20: #{graph_actor_critic_forward.5} parent=0 // pred_region
    _
  $region21: #{graph_actor_critic_forward.5} parent=0 // pred_fallthru
    _
  // Predicated region
  $region22: #{graph_actor_critic_forward.5} parent=0 // pred_check
    _
  $region23: #{graph_actor_critic_forward.5} parent=0 // pred_check_branch
    %25 = sbr.rel (0) target = $region25
  $region24: #{graph_actor_critic_forward.5} parent=0 // pred_region
    _
  $region25: #{graph_actor_critic_forward.5} parent=0 // pred_fallthru
    _
  // Predicated region
  $region26: #{graph_actor_critic_forward.5} parent=0 // pred_check
    _
  $region27: #{graph_actor_critic_forward.5} parent=0 // pred_check_branch
    %27 = sbr.rel (0) target = $region29
  $region28: #{graph_actor_critic_forward.5} parent=0 // pred_region
    _
  $region29: #{graph_actor_critic_forward.5} parent=0 // pred_fallthru
    _
  %v28 = vld [vmem:[%s1] sm:$0x1]
  %v29 = vld [vmem:[%s2] sm:$0xff]
  %v30 = vld [vmem:[%s2 + $0x8] sm:$0xff]
  %v31 = vld [vmem:[%s2 + $0x10] sm:$0xff]
  %v32 = vld [vmem:[%s2 + $0x18] sm:$0xff]
  %v33 = vld [vmem:[%s3] sm:$0x1]
  %v34 = vld [vmem:[%s4] sm:$0xff]
  %v35 = vld [vmem:[%s4 + $0x8] sm:$0xff]
  %v36 = vld [vmem:[%s4 + $0x10] sm:$0xff]
  %v37 = vld [vmem:[%s4 + $0x18] sm:$0xff]
  %v38 = vld [vmem:[#allocation3] sm:$0x1]
  %v39 = vld [vmem:[%s6] sm:$0x1]
  %v40 = vld [vmem:[%s0] sm:$0xff]
  %v42 = vlaneseq
  %v43 = vshrl.u32 %v42, 7
  %v44 = vsub.s32 0, %v43
  %v45 = vrot.slane %v28, %v44
  %v47 = vadd.f32 %v40, %v45
  %v48 = vmax.f32 %v47, 0.0
  %vm49 = vcmask 261120
  %50 = vst.msk [vmem:[#allocation2] sm:$0xff] %vm49, %v48
  %s51 = scalar_lea.vmem %s0, 8
  %v52 = vld [vmem:[%s51] sm:$0xff]
  %v53 = vadd.f32 %v52, %v45
  %v54 = vmax.f32 %v53, 0.0
  %55 = vst.msk [vmem:[#allocation2 + $0x8] sm:$0xff] %vm49, %v54
  %v56 = vld [vmem:[#allocation2] sm:$0xff]
  %v57 = vld [vmem:[#allocation2 + $0x8] sm:$0xff]
  %v59 = vlaneseq
  %v60 = vshrl.u32 %v59, 7
  %v61 = vsub.s32 0, %v60
  %v62 = vrot.slane %v33, %v61
  %v65 = vsel %vm49, %v56, 0
  %v68 = vsel %vm49, %v57, 0
  %70 = vmatprep.subr.mxu0 0.0
  %71 = vmatpush1.msra.mxu0 %v29
  %72 = vmatprep.subr.mxu0 0.0
  %73 = vmatpush1.msra.mxu0 %v30
  %74 = vmatprep.subr.mxu0 0.0
  %75 = vmatpush1.msra.mxu0 %v31
  %76 = vmatprep.subr.mxu0 0.0
  %77 = vmatpush1.msra.mxu0 %v32
  %78 = vmatprep.subr.mxu0 0.0
  %79 = vmatpush1.msra.mxu0 0.0
  %80 = vmatprep.subr.mxu0 0.0
  %81 = vmatpush1.msra.mxu0 0.0
  %82 = vmatprep.subr.mxu0 0.0
  %83 = vmatpush1.msra.mxu0 0.0
  %84 = vmatprep.subr.mxu0 0.0
  %85 = vmatpush1.msra.mxu0 0.0
  %86 = vmatprep.subr.mxu0 0.0
  %87 = vmatpush1.msra.mxu0 0.0
  %88 = vmatprep.subr.mxu0 0.0
  %89 = vmatpush1.msra.mxu0 0.0
  %90 = vmatprep.subr.mxu0 0.0
  %91 = vmatpush1.msra.mxu0 0.0
  %92 = vmatprep.subr.mxu0 0.0
  %93 = vmatpush1.msra.mxu0 0.0
  %94 = vmatprep.subr.mxu0 0.0
  %95 = vmatpush1.msra.mxu0 0.0
  %96 = vmatprep.subr.mxu0 0.0
  %97 = vmatpush1.msra.mxu0 0.0
  %98 = vmatprep.subr.mxu0 0.0
  %99 = vmatpush1.msra.mxu0 0.0
  %100 = vmatprep.subr.mxu0 0.0
  %101 = vmatpush1.msra.mxu0 0.0
  %102 = vmatprep.subr.mxu0 0.0
  %103 = vmatpush1.msra.mxu0 0.0
  %104 = vmatprep.subr.mxu0 0.0
  %105 = vmatpush1.msra.mxu0 0.0
  %106 = vmatprep.subr.mxu0 0.0
  %107 = vmatpush1.msra.mxu0 0.0
  %108 = vmatprep.subr.mxu0 0.0
  %109 = vmatpush1.msra.mxu0 0.0
  %110 = vmatprep.subr.mxu0 0.0
  %111 = vmatpush1.msra.mxu0 0.0
  %112 = vmatprep.subr.mxu0 0.0
  %113 = vmatpush1.msra.mxu0 0.0
  %114 = vmatprep.subr.mxu0 0.0
  %115 = vmatpush1.msra.mxu0 0.0
  %116 = vmatprep.subr.mxu0 0.0
  %117 = vmatpush1.msra.mxu0 0.0
  %118 = vmatprep.subr.mxu0 0.0
  %119 = vmatpush1.msra.mxu0 0.0
  %120 = vmatprep.subr.mxu0 0.0
  %121 = vmatpush1.msra.mxu0 0.0
  %122 = vmatprep.subr.mxu0 0.0
  %123 = vmatpush1.msra.mxu0 0.0
  %124 = vmatprep.subr.mxu0 0.0
  %125 = vmatpush1.msra.mxu0 0.0
  %126 = vmatprep.subr.mxu0 0.0
  %127 = vmatpush1.msra.mxu0 0.0
  %128 = vmatprep.subr.mxu0 0.0
  %129 = vmatpush1.msra.mxu0 0.0
  %130 = vmatprep.subr.mxu0 0.0
  %131 = vmatpush1.msra.mxu0 0.0
  %132 = vmatprep.subr.mxu0 0.0
  %133 = vmatpush1.msra.mxu0 0.0
  %134 = vmatprep.mubr.f32.mxu0 0.0
  %135 = vmatmul.mubr.f32.gmra.mrb[0].mxu0 %v65
  %v136 = vpop.f32.mrb[0].mxu0
  %v137 = vadd.f32 %v62, %v136
  %v138 = vpop.f32.mrb[0].mxu0
  %139 = vmatprep.mubr.f32.mxu0 0.0
  %140 = vmatmul.mubr.f32.gmra.mrb[0].mxu0 %v68
  %v141 = vpop.f32.mrb[0].mxu0
  %v142 = vadd.f32 %v62, %v141
  %v143 = vpop.f32.mrb[0].mxu0
  %144 = vdwg.mxu0
  %v145 = vmax.f32 %v137, 0.0
  %v146 = vmax.f32 %v142, 0.0
  %vm147 = vcmask 64512
  %v149 = vsel %vm147, %v39, 0
  %151 = vmatprep.subr.mxu0 0.0
  %152 = vmatpush1.msra.mxu0 %v145
  %153 = vmatprep.subr.mxu0 0.0
  %154 = vmatpush1.msra.mxu0 0.0
  %155 = vmatprep.subr.mxu0 0.0
  %156 = vmatpush1.msra.mxu0 0.0
  %157 = vmatprep.subr.mxu0 0.0
  %158 = vmatpush1.msra.mxu0 0.0
  %159 = vmatprep.subr.mxu0 0.0
  %160 = vmatpush1.msra.mxu0 0.0
  %161 = vmatprep.subr.mxu0 0.0
  %162 = vmatpush1.msra.mxu0 0.0
  %163 = vmatprep.subr.mxu0 0.0
  %164 = vmatpush1.msra.mxu0 0.0
  %165 = vmatprep.subr.mxu0 0.0
  %166 = vmatpush1.msra.mxu0 0.0
  %167 = vmatprep.subr.mxu0 0.0
  %168 = vmatpush1.msra.mxu0 0.0
  %169 = vmatprep.subr.mxu0 0.0
  %170 = vmatpush1.msra.mxu0 0.0
  %171 = vmatprep.subr.mxu0 0.0
  %172 = vmatpush1.msra.mxu0 0.0
  %173 = vmatprep.subr.mxu0 0.0
  %174 = vmatpush1.msra.mxu0 0.0
  %175 = vmatprep.subr.mxu0 0.0
  %176 = vmatpush1.msra.mxu0 0.0
  %177 = vmatprep.subr.mxu0 0.0
  %178 = vmatpush1.msra.mxu0 0.0
  %179 = vmatprep.subr.mxu0 0.0
  %180 = vmatpush1.msra.mxu0 0.0
  %181 = vmatprep.subr.mxu0 0.0
  %182 = vmatpush1.msra.mxu0 0.0
  %183 = vmatprep.subr.mxu0 0.0
  %184 = vmatpush1.msra.mxu0 0.0
  %185 = vmatprep.subr.mxu0 0.0
  %186 = vmatpush1.msra.mxu0 0.0
  %187 = vmatprep.subr.mxu0 0.0
  %188 = vmatpush1.msra.mxu0 0.0
  %189 = vmatprep.subr.mxu0 0.0
  %190 = vmatpush1.msra.mxu0 0.0
  %191 = vmatprep.subr.mxu0 0.0
  %192 = vmatpush1.msra.mxu0 0.0
  %193 = vmatprep.subr.mxu0 0.0
  %194 = vmatpush1.msra.mxu0 0.0
  %195 = vmatprep.subr.mxu0 0.0
  %196 = vmatpush1.msra.mxu0 0.0
  %197 = vmatprep.subr.mxu0 0.0
  %198 = vmatpush1.msra.mxu0 0.0
  %199 = vmatprep.subr.mxu0 0.0
  %200 = vmatpush1.msra.mxu0 0.0
  %201 = vmatprep.subr.mxu0 0.0
  %202 = vmatpush1.msra.mxu0 0.0
  %203 = vmatprep.subr.mxu0 0.0
  %204 = vmatpush1.msra.mxu0 0.0
  %205 = vmatprep.subr.mxu0 0.0
  %206 = vmatpush1.msra.mxu0 0.0
  %207 = vmatprep.subr.mxu0 0.0
  %208 = vmatpush1.msra.mxu0 0.0
  %209 = vmatprep.subr.mxu0 0.0
  %210 = vmatpush1.msra.mxu0 0.0
  %211 = vmatprep.subr.mxu0 0.0
  %212 = vmatpush1.msra.mxu0 0.0
  %213 = vmatprep.subr.mxu0 0.0
  %214 = vmatpush1.msra.mxu0 0.0
  %215 = vmatprep.mubr.f32.mxu0 0.0
  %216 = vmatmul.mubr.f32.gmra.mrb[0].mxu0 %v149
  %v217 = vpop.f32.mrb[0].mxu0
  %v218 = vadd.f32 0.0, %v217
  %v219 = vpop.f32.mrb[0].mxu0
  %220 = vdwg.mxu0
  %v221 = vmul.f32 %v38, 8.0
  %v223 = vsel %vm49, %v218, 0
  %225 = vmatprep.subr.mxu0 0.0
  %226 = vmatpush1.msra.mxu0 %v34
  %227 = vmatprep.subr.mxu0 0.0
  %228 = vmatpush1.msra.mxu0 %v35
  %229 = vmatprep.subr.mxu0 0.0
  %230 = vmatpush1.msra.mxu0 %v36
  %231 = vmatprep.subr.mxu0 0.0
  %232 = vmatpush1.msra.mxu0 %v37
  %233 = vmatprep.subr.mxu0 0.0
  %234 = vmatpush1.msra.mxu0 0.0
  %235 = vmatprep.subr.mxu0 0.0
  %236 = vmatpush1.msra.mxu0 0.0
  %237 = vmatprep.subr.mxu0 0.0
  %238 = vmatpush1.msra.mxu0 0.0
  %239 = vmatprep.subr.mxu0 0.0
  %240 = vmatpush1.msra.mxu0 0.0
  %241 = vmatprep.subr.mxu0 0.0
  %242 = vmatpush1.msra.mxu0 0.0
  %243 = vmatprep.subr.mxu0 0.0
  %244 = vmatpush1.msra.mxu0 0.0
  %245 = vmatprep.subr.mxu0 0.0
  %246 = vmatpush1.msra.mxu0 0.0
  %247 = vmatprep.subr.mxu0 0.0
  %248 = vmatpush1.msra.mxu0 0.0
  %249 = vmatprep.subr.mxu0 0.0
  %250 = vmatpush1.msra.mxu0 0.0
  %251 = vmatprep.subr.mxu0 0.0
  %252 = vmatpush1.msra.mxu0 0.0
  %253 = vmatprep.subr.mxu0 0.0
  %254 = vmatpush1.msra.mxu0 0.0
  %255 = vmatprep.subr.mxu0 0.0
  %256 = vmatpush1.msra.mxu0 0.0
  %257 = vmatprep.subr.mxu0 0.0
  %258 = vmatpush1.msra.mxu0 0.0
  %259 = vmatprep.subr.mxu0 0.0
  %260 = vmatpush1.msra.mxu0 0.0
  %261 = vmatprep.subr.mxu0 0.0
  %262 = vmatpush1.msra.mxu0 0.0
  %263 = vmatprep.subr.mxu0 0.0
  %264 = vmatpush1.msra.mxu0 0.0
  %265 = vmatprep.subr.mxu0 0.0
  %266 = vmatpush1.msra.mxu0 0.0
  %267 = vmatprep.subr.mxu0 0.0
  %268 = vmatpush1.msra.mxu0 0.0
  %269 = vmatprep.subr.mxu0 0.0
  %270 = vmatpush1.msra.mxu0 0.0
  %271 = vmatprep.subr.mxu0 0.0
  %272 = vmatpush1.msra.mxu0 0.0
  %273 = vmatprep.subr.mxu0 0.0
  %274 = vmatpush1.msra.mxu0 0.0
  %275 = vmatprep.subr.mxu0 0.0
  %276 = vmatpush1.msra.mxu0 0.0
  %277 = vmatprep.subr.mxu0 0.0
  %278 = vmatpush1.msra.mxu0 0.0
  %279 = vmatprep.subr.mxu0 0.0
  %280 = vmatpush1.msra.mxu0 0.0
  %281 = vmatprep.subr.mxu0 0.0
  %282 = vmatpush1.msra.mxu0 0.0
  %283 = vmatprep.subr.mxu0 0.0
  %284 = vmatpush1.msra.mxu0 0.0
  %285 = vmatprep.subr.mxu0 0.0
  %286 = vmatpush1.msra.mxu0 0.0
  %287 = vmatprep.subr.mxu0 0.0
  %288 = vmatpush1.msra.mxu0 0.0
  %289 = vmatprep.mubr.f32.mxu0 0.0
  %290 = vmatmul.mubr.f32.gmra.mrb[0].mxu0 %v223
  %v291 = vpop.f32.mrb[0].mxu0
  %v292 = vadd.f32 %v221, %v291
  %v293 = vpop.f32.mrb[0].mxu0
  %294 = vdwg.mxu0
  %vm295 = vcmask 0
  %296 = vst.msk [vmem:[%s7] sm:$0x1] %vm295, %v292
  %297 = vmatprep.subr.mxu0 0.0
  %298 = vmatpush1.msra.mxu0 %v146
  %299 = vmatprep.subr.mxu0 0.0
  %300 = vmatpush1.msra.mxu0 0.0
  %301 = vmatprep.subr.mxu0 0.0
  %302 = vmatpush1.msra.mxu0 0.0
  %303 = vmatprep.subr.mxu0 0.0
  %304 = vmatpush1.msra.mxu0 0.0
  %305 = vmatprep.subr.mxu0 0.0
  %306 = vmatpush1.msra.mxu0 0.0
  %307 = vmatprep.subr.mxu0 0.0
  %308 = vmatpush1.msra.mxu0 0.0
  %309 = vmatprep.subr.mxu0 0.0
  %310 = vmatpush1.msra.mxu0 0.0
  %311 = vmatprep.subr.mxu0 0.0
  %312 = vmatpush1.msra.mxu0 0.0
  %313 = vmatprep.subr.mxu0 0.0
  %314 = vmatpush1.msra.mxu0 0.0
  %315 = vmatprep.subr.mxu0 0.0
  %316 = vmatpush1.msra.mxu0 0.0
  %317 = vmatprep.subr.mxu0 0.0
  %318 = vmatpush1.msra.mxu0 0.0
  %319 = vmatprep.subr.mxu0 0.0
  %320 = vmatpush1.msra.mxu0 0.0
  %321 = vmatprep.subr.mxu0 0.0
  %322 = vmatpush1.msra.mxu0 0.0
  %323 = vmatprep.subr.mxu0 0.0
  %324 = vmatpush1.msra.mxu0 0.0
  %325 = vmatprep.subr.mxu0 0.0
  %326 = vmatpush1.msra.mxu0 0.0
  %327 = vmatprep.subr.mxu0 0.0
  %328 = vmatpush1.msra.mxu0 0.0
  %329 = vmatprep.subr.mxu0 0.0
  %330 = vmatpush1.msra.mxu0 0.0
  %331 = vmatprep.subr.mxu0 0.0
  %332 = vmatpush1.msra.mxu0 0.0
  %333 = vmatprep.subr.mxu0 0.0
  %334 = vmatpush1.msra.mxu0 0.0
  %335 = vmatprep.subr.mxu0 0.0
  %336 = vmatpush1.msra.mxu0 0.0
  %337 = vmatprep.subr.mxu0 0.0
  %338 = vmatpush1.msra.mxu0 0.0
  %339 = vmatprep.subr.mxu0 0.0
  %340 = vmatpush1.msra.mxu0 0.0
  %341 = vmatprep.subr.mxu0 0.0
  %342 = vmatpush1.msra.mxu0 0.0
  %343 = vmatprep.subr.mxu0 0.0
  %344 = vmatpush1.msra.mxu0 0.0
  %345 = vmatprep.subr.mxu0 0.0
  %346 = vmatpush1.msra.mxu0 0.0
  %347 = vmatprep.subr.mxu0 0.0
  %348 = vmatpush1.msra.mxu0 0.0
  %349 = vmatprep.subr.mxu0 0.0
  %350 = vmatpush1.msra.mxu0 0.0
  %351 = vmatprep.subr.mxu0 0.0
  %352 = vmatpush1.msra.mxu0 0.0
  %353 = vmatprep.subr.mxu0 0.0
  %354 = vmatpush1.msra.mxu0 0.0
  %355 = vmatprep.subr.mxu0 0.0
  %356 = vmatpush1.msra.mxu0 0.0
  %357 = vmatprep.subr.mxu0 0.0
  %358 = vmatpush1.msra.mxu0 0.0
  %359 = vmatprep.subr.mxu0 0.0
  %360 = vmatpush1.msra.mxu0 0.0
  %361 = vmatprep.mubr.f32.mxu0 0.0
  %362 = vmatmul.mubr.f32.gmra.mrb[0].mxu0 %v149
  %v363 = vpop.f32.mrb[0].mxu0
  %v364 = vadd.f32 0.0, %v363
  %v365 = vpop.f32.mrb[0].mxu0
  %366 = vdwg.mxu0
  %v368 = vsel %vm49, %v364, 0
  %370 = vmatprep.subr.mxu0 0.0
  %371 = vmatpush1.msra.mxu0 %v34
  %372 = vmatprep.subr.mxu0 0.0
  %373 = vmatpush1.msra.mxu0 %v35
  %374 = vmatprep.subr.mxu0 0.0
  %375 = vmatpush1.msra.mxu0 %v36
  %376 = vmatprep.subr.mxu0 0.0
  %377 = vmatpush1.msra.mxu0 %v37
  %378 = vmatprep.subr.mxu0 0.0
  %379 = vmatpush1.msra.mxu0 0.0
  %380 = vmatprep.subr.mxu0 0.0
  %381 = vmatpush1.msra.mxu0 0.0
  %382 = vmatprep.subr.mxu0 0.0
  %383 = vmatpush1.msra.mxu0 0.0
  %384 = vmatprep.subr.mxu0 0.0
  %385 = vmatpush1.msra.mxu0 0.0
  %386 = vmatprep.subr.mxu0 0.0
  %387 = vmatpush1.msra.mxu0 0.0
  %388 = vmatprep.subr.mxu0 0.0
  %389 = vmatpush1.msra.mxu0 0.0
  %390 = vmatprep.subr.mxu0 0.0
  %391 = vmatpush1.msra.mxu0 0.0
  %392 = vmatprep.subr.mxu0 0.0
  %393 = vmatpush1.msra.mxu0 0.0
  %394 = vmatprep.subr.mxu0 0.0
  %395 = vmatpush1.msra.mxu0 0.0
  %396 = vmatprep.subr.mxu0 0.0
  %397 = vmatpush1.msra.mxu0 0.0
  %398 = vmatprep.subr.mxu0 0.0
  %399 = vmatpush1.msra.mxu0 0.0
  %400 = vmatprep.subr.mxu0 0.0
  %401 = vmatpush1.msra.mxu0 0.0
  %402 = vmatprep.subr.mxu0 0.0
  %403 = vmatpush1.msra.mxu0 0.0
  %404 = vmatprep.subr.mxu0 0.0
  %405 = vmatpush1.msra.mxu0 0.0
  %406 = vmatprep.subr.mxu0 0.0
  %407 = vmatpush1.msra.mxu0 0.0
  %408 = vmatprep.subr.mxu0 0.0
  %409 = vmatpush1.msra.mxu0 0.0
  %410 = vmatprep.subr.mxu0 0.0
  %411 = vmatpush1.msra.mxu0 0.0
  %412 = vmatprep.subr.mxu0 0.0
  %413 = vmatpush1.msra.mxu0 0.0
  %414 = vmatprep.subr.mxu0 0.0
  %415 = vmatpush1.msra.mxu0 0.0
  %416 = vmatprep.subr.mxu0 0.0
  %417 = vmatpush1.msra.mxu0 0.0
  %418 = vmatprep.subr.mxu0 0.0
  %419 = vmatpush1.msra.mxu0 0.0
  %420 = vmatprep.subr.mxu0 0.0
  %421 = vmatpush1.msra.mxu0 0.0
  %422 = vmatprep.subr.mxu0 0.0
  %423 = vmatpush1.msra.mxu0 0.0
  %424 = vmatprep.subr.mxu0 0.0
  %425 = vmatpush1.msra.mxu0 0.0
  %426 = vmatprep.subr.mxu0 0.0
  %427 = vmatpush1.msra.mxu0 0.0
  %428 = vmatprep.subr.mxu0 0.0
  %429 = vmatpush1.msra.mxu0 0.0
  %430 = vmatprep.subr.mxu0 0.0
  %431 = vmatpush1.msra.mxu0 0.0
  %432 = vmatprep.subr.mxu0 0.0
  %433 = vmatpush1.msra.mxu0 0.0
  %434 = vmatprep.mubr.f32.mxu0 0.0
  %435 = vmatmul.mubr.f32.gmra.mrb[0].mxu0 %v368
  %v436 = vpop.f32.mrb[0].mxu0
  %v437 = vadd.f32 %v221, %v436
  %v438 = vpop.f32.mrb[0].mxu0
  %439 = vdwg.mxu0
  %440 = vst.msk [vmem:[%s7 + $0x1] sm:$0x1] %vm295, %v437
  // Predicated region
  $region30: #{graph_actor_critic_forward.5} parent=0 // pred_check
    _
  $region31: #{graph_actor_critic_forward.5} parent=0 // pred_check_branch
    %442 = sbr.rel (0) target = $region33
  $region32: #{graph_actor_critic_forward.5} parent=0 // pred_region
    _
  $region33: #{graph_actor_critic_forward.5} parent=0 // pred_fallthru
    _
  // Predicated region
  $region34: #{graph_actor_critic_forward.5} parent=0 // pred_check
    _
  $region35: #{graph_actor_critic_forward.5} parent=0 // pred_check_branch
    %444 = sbr.rel (0) target = $region37
  $region36: #{graph_actor_critic_forward.5} parent=0 // pred_region
    _
  $region37: #{graph_actor_critic_forward.5} parent=0 // pred_fallthru
    _

</llo_original>
